<compile_context>
chip_gen: v7x
topology: tpu7x:2x2x1
jax: 0.10.0
libtpu: 0.0.40
codegen_flags: <defaults>
</compile_context>

<pallas_src>
import jax
import jax.numpy as jnp
from jax.experimental import pallas as pl
from jax.experimental.pallas import tpu as pltpu

EPS = 1e-5          # nn.BatchNorm2d default eps
NEG_SLOPE = 0.01    # nn.LeakyReLU default negative_slope

# Set to jnp.bfloat16 on v5e/v6e for ~2-4x MXU throughput (requires a looser
# tolerance than the 1e-4 check below, so f32 is the default here).
MXU_DTYPE = jnp.float32


def _residual_block_kernel(x_ref, w1_ref, g1_ref, be1_ref,
                           w2_ref, g2_ref, be2_ref,
                           fold_ref, spread_ref, o_ref):
    """Fused conv1 -> bn1 -> lrelu -> conv2 -> bn2 -> (+x), all lane-dense.

    x_ref:            (N, H, W*C)      lane-dense NHWC input
    w1_ref, w2_ref:   (3*W*C, W*C)     banded conv weights (W-halo as zeros)
    g*, be*:          (1, C)           BN gamma / beta
    fold_ref:         (W*C, C)         per-channel fold (sum over W groups)
    spread_ref:       (C, W*C)         per-channel spread (broadcast over W)
    o_ref:            (N, H, W*C)      lane-dense output
    """
    N, H, WC = x_ref.shape
    C = g1_ref.shape[1]
    W = WC // C
    M = N * H
    inv_cnt = 1.0 / (N * H * W)

    zero_row = jnp.zeros((N, 1, WC), jnp.float32)

    def conv3x3(x3, w_ref):
        # H-direction halo via two masked row shifts; the W-direction zero
        # padding is structural zeros inside the banded weights, so no padded
        # scratch buffer is needed at all.
        up = jnp.concatenate([zero_row, x3[:, :H - 1, :]], axis=1)   # row r-1
        dn = jnp.concatenate([x3[:, 1:, :], zero_row], axis=1)       # row r+1
        patch = jnp.concatenate([up, x3, dn], axis=-1).reshape(M, 3 * WC)
        return jnp.dot(patch.astype(w_ref.dtype), w_ref[...],
                       preferred_element_type=jnp.float32)           # (M, WC)

    def batchnorm(acc, g_ref, be_ref):
        # Per-channel batch stats, two-pass (shifted) variance for stability.
        s_lane = jnp.sum(acc, axis=0, keepdims=True)                 # (1, WC)
        mean_c = jnp.dot(s_lane, fold_ref[...],
                         preferred_element_type=jnp.float32) * inv_cnt  # (1, C)
        mean_ld = jnp.dot(mean_c, spread_ref[...],
                          preferred_element_type=jnp.float32)        # (1, WC)
        centered = acc - mean_ld                                     # (M, WC)
        ss_lane = jnp.sum(centered * centered, axis=0, keepdims=True)
        var_c = jnp.dot(ss_lane, fold_ref[...],
                        preferred_element_type=jnp.float32) * inv_cnt
        scale_c = g_ref[...] * jax.lax.rsqrt(var_c + EPS)            # (1, C)
        scale_ld = jnp.dot(scale_c, spread_ref[...],
                           preferred_element_type=jnp.float32)       # (1, WC)
        shift_ld = jnp.dot(be_ref[...], spread_ref[...],
                           preferred_element_type=jnp.float32)       # (1, WC)
        return centered * scale_ld + shift_ld

    x3 = x_ref[...]

    # ---- stage 1: conv1 + bn1 + leaky_relu (conv bias cancelled by BN) -----
    h = batchnorm(conv3x3(x3, w1_ref), g1_ref, be1_ref)
    h = jnp.where(h > 0, h, NEG_SLOPE * h)

    # ---- stage 2: conv2 + bn2 + residual add; h never touches HBM ----------
    h2 = batchnorm(conv3x3(h.reshape(N, H, WC), w2_ref), g2_ref, be2_ref)
    o_ref[...] = (h2 + x3.reshape(M, WC)).reshape(N, H, WC)


def _banded_conv_weights(w_hwio, W):
    """(3, 3, Cin, Cout) HWIO -> (3*W*Cin, W*Cout) banded matrix.

    With a lane-dense activation row X[r] of length W*Cin, a padding=1 3x3 conv
    becomes  Y[r] = [X[r-1], X[r], X[r+1]] @ Wb  (zero rows outside the image);
    the W-direction zero halo is encoded as structural zeros in the band.
    """
    KH, KW, Cin, Cout = w_hwio.shape
    blocks = []
    for ky in range(KH):
        wb = jnp.zeros((W * Cin, W * Cout), w_hwio.dtype)
        for kx in range(KW):
            # band[w_in, w_out] = 1  iff  w_in = w_out + kx - 1
            band = jnp.eye(W, W, k=1 - kx, dtype=w_hwio.dtype)
            wb = wb + jnp.kron(band, w_hwio[ky, kx])
        blocks.append(wb)
    return jnp.concatenate(blocks, axis=0)


def residual_block_pallas_nhwc(x_nhwc, params):
    """NHWC fast path (no layout transposes)."""
    w1, b1, g1, be1, w2, b2, g2, be2 = params
    del b1, b2  # exactly cancelled by batch-stats BatchNorm (training mode)
    N, H, W, C = x_nhwc.shape
    WC = W * C
    assert WC % 128 == 0, "lane-dense layout wants W*C to be a multiple of 128"

    wb1 = _banded_conv_weights(w1.astype(jnp.float32), W).astype(MXU_DTYPE)
    wb2 = _banded_conv_weights(w2.astype(jnp.float32), W).astype(MXU_DTYPE)
    fold = jnp.tile(jnp.eye(C, dtype=jnp.float32), (W, 1))     # (WC, C)
    spread = jnp.tile(jnp.eye(C, dtype=jnp.float32), (1, W))   # (C, WC)

    x_ld = x_nhwc.reshape(N, H, WC).astype(jnp.float32)        # free, contiguous

    vmem = pl.BlockSpec(memory_space=pltpu.MemorySpace.VMEM)
    out_ld = pl.pallas_call(
        _residual_block_kernel,
        out_shape=jax.ShapeDtypeStruct((N, H, WC), jnp.float32),
        in_specs=[vmem] * 9,
        out_specs=vmem,
    )(x_ld, wb1, g1.reshape(1, C), be1.reshape(1, C),
      wb2, g2.reshape(1, C), be2.reshape(1, C), fold, spread)

    return out_ld.reshape(N, H, W, C)


def residual_block_pallas(x_nchw, params):
    """Forward pass equivalent to ResidualBlock.forward(x) (NCHW in/out)."""
    x = jnp.transpose(x_nchw, (0, 2, 3, 1))                    # -> NHWC
    out = residual_block_pallas_nhwc(x, params)
    return jnp.transpose(out, (0, 3, 1, 2))                    # -> NCHW


def residual_block_ref(x_nchw, params):
    """Pure-JAX reference (same math as the PyTorch module, XLA conv)."""
    w1, b1, g1, be1, w2, b2, g2, be2 = params
    x = jnp.transpose(x_nchw, (0, 2, 3, 1)).astype(jnp.float32)

    def conv(h, w, b):
        y = jax.lax.conv_general_dilated(
            h, w, window_strides=(1, 1), padding=((1, 1), (1, 1)),
            dimension_numbers=('NHWC', 'HWIO', 'NHWC'))
        return y + b.reshape(1, 1, 1, -1)

    def bn(h, g, be):
        mean = jnp.mean(h, axis=(0, 1, 2), keepdims=True)
        var = jnp.mean((h - mean) ** 2, axis=(0, 1, 2), keepdims=True)
        return (h - mean) * jax.lax.rsqrt(var + EPS) * g.reshape(1, 1, 1, -1) \
            + be.reshape(1, 1, 1, -1)

    h = bn(conv(x, w1, b1), g1, be1)
    h = jnp.where(h > 0, h, NEG_SLOPE * h)
    h = bn(conv(h, w2, b2), g2, be2)
    return jnp.transpose(h + x, (0, 3, 1, 2))


def make_params(key, c):
    """Deterministic synthetic parameters (HWIO conv weights, BN affine)."""
    ks = jax.random.split(key, 8)
    w1 = jax.random.normal(ks[0], (3, 3, c, c), jnp.float32) * 0.1
    b1 = jax.random.normal(ks[1], (c,), jnp.float32) * 0.1
    g1 = 1.0 + 0.1 * jax.random.normal(ks[2], (c,), jnp.float32)
    be1 = jax.random.normal(ks[3], (c,), jnp.float32) * 0.1
    w2 = jax.random.normal(ks[4], (3, 3, c, c), jnp.float32) * 0.1
    b2 = jax.random.normal(ks[5], (c,), jnp.float32) * 0.1
    g2 = 1.0 + 0.1 * jax.random.normal(ks[6], (c,), jnp.float32)
    be2 = jax.random.normal(ks[7], (c,), jnp.float32) * 0.1
    return (w1, b1, g1, be1, w2, b2, g2, be2)


if __name__ == "__main__":
    key = jax.random.PRNGKey(0)
    k_x, k_p = jax.random.split(key)

    N, C, H, W = 2, 8, 16, 16                 # in_c_and_out_c = C; W*C = 128
    x = jax.random.normal(k_x, (N, C, H, W), jnp.float32)
    params = make_params(k_p, C)

    out = jax.block_until_ready(residual_block_pallas(x, params))
    ref = jax.block_until_ready(residual_block_ref(x, params))

    assert out.shape == x.shape, "error design"
    assert jnp.allclose(out, ref, rtol=1e-4, atol=1e-4), (
        "mismatch vs reference: max abs err "
        f"{float(jnp.max(jnp.abs(out - ref)))}")
    print("KERNEL_OK")
</pallas_src>

<mosaic_0001>
module attributes {stable_mosaic.version = 11 : i64} {
  func.func @_residual_block_kernel(%arg0: memref<2x16x128xf32, #tpu.memory_space<vmem>>, %arg1: memref<384x128xf32, #tpu.memory_space<vmem>>, %arg2: memref<1x8xf32, #tpu.memory_space<vmem>>, %arg3: memref<1x8xf32, #tpu.memory_space<vmem>>, %arg4: memref<384x128xf32, #tpu.memory_space<vmem>>, %arg5: memref<1x8xf32, #tpu.memory_space<vmem>>, %arg6: memref<1x8xf32, #tpu.memory_space<vmem>>, %arg7: memref<128x8xf32, #tpu.memory_space<vmem>>, %arg8: memref<8x128xf32, #tpu.memory_space<vmem>>, %arg9: memref<2x16x128xf32, #tpu.memory_space<vmem>>) attributes {dimension_semantics = [], scalar_prefetch = 0 : i64, scratch_operands = 0 : i64, tpu.core_type = #tpu.core_type<tc>} {
    %cst = arith.constant 0.000000e+00 : f32
    %0 = vector.broadcast %cst : f32 to vector<2x1x128xf32>
    %c0 = arith.constant 0 : index
    %c0_0 = arith.constant 0 : index
    %c0_1 = arith.constant 0 : index
    %1 = vector.load %arg0[%c0, %c0_0, %c0_1] : memref<2x16x128xf32, #tpu.memory_space<vmem>>, vector<2x16x128xf32>
    %2 = vector.extract_strided_slice %1 {offsets = [0, 0, 0], sizes = [2, 15, 128], strides = [1, 1, 1]} : vector<2x16x128xf32> to vector<2x15x128xf32>
    %3 = tpu.concatenate %0, %2 in 1 : vector<2x1x128xf32>, vector<2x15x128xf32> -> vector<2x16x128xf32>
    %4 = vector.extract_strided_slice %1 {offsets = [0, 1, 0], sizes = [2, 15, 128], strides = [1, 1, 1]} : vector<2x16x128xf32> to vector<2x15x128xf32>
    %5 = tpu.concatenate %4, %0 in 1 : vector<2x15x128xf32>, vector<2x1x128xf32> -> vector<2x16x128xf32>
    %6 = tpu.concatenate %3, %1, %5 in 2 : vector<2x16x128xf32>, vector<2x16x128xf32>, vector<2x16x128xf32> -> vector<2x16x384xf32>
    %7 = vector.shape_cast %6 : vector<2x16x384xf32> to vector<32x384xf32>
    %c0_2 = arith.constant 0 : index
    %c0_3 = arith.constant 0 : index
    %8 = vector.load %arg1[%c0_2, %c0_3] : memref<384x128xf32, #tpu.memory_space<vmem>>, vector<384x128xf32>
    %cst_4 = arith.constant dense<0.000000e+00> : vector<32x128xf32>
    %9 = tpu.matmul %7, %8, %cst_4 {dimension_numbers = #tpu.dot_dimension_numbers<[1], [0], [0], [1], [0, 0, 1, 1], [], []>} : vector<32x384xf32>, vector<384x128xf32>, vector<32x128xf32> -> vector<32x128xf32>
    %cst_5 = arith.constant dense<0.000000e+00> : vector<128xf32>
    %10 = vector.multi_reduction <add>, %9, %cst_5 [0] : vector<32x128xf32> to vector<128xf32>
    %11 = vector.shape_cast %10 : vector<128xf32> to vector<1x128xf32>
    %c0_6 = arith.constant 0 : index
    %c0_7 = arith.constant 0 : index
    %12 = vector.load %arg7[%c0_6, %c0_7] : memref<128x8xf32, #tpu.memory_space<vmem>>, vector<128x8xf32>
    %cst_8 = arith.constant dense<0.000000e+00> : vector<1x8xf32>
    %13 = tpu.matmul %11, %12, %cst_8 {dimension_numbers = #tpu.dot_dimension_numbers<[1], [0], [0], [1], [0, 0, 1, 1], [], []>} : vector<1x128xf32>, vector<128x8xf32>, vector<1x8xf32> -> vector<1x8xf32>
    %cst_9 = arith.constant 0.001953125 : f32
    %14 = vector.broadcast %cst_9 : f32 to vector<1x8xf32>
    %15 = arith.mulf %13, %14 : vector<1x8xf32>
    %c0_10 = arith.constant 0 : index
    %c0_11 = arith.constant 0 : index
    %16 = vector.load %arg8[%c0_10, %c0_11] : memref<8x128xf32, #tpu.memory_space<vmem>>, vector<8x128xf32>
    %cst_12 = arith.constant dense<0.000000e+00> : vector<1x128xf32>
    %17 = tpu.matmul %15, %16, %cst_12 {dimension_numbers = #tpu.dot_dimension_numbers<[1], [0], [0], [1], [0, 0, 1, 1], [], []>} : vector<1x8xf32>, vector<8x128xf32>, vector<1x128xf32> -> vector<1x128xf32>
    %18 = vector.broadcast %17 : vector<1x128xf32> to vector<32x128xf32>
    %19 = arith.subf %9, %18 : vector<32x128xf32>
    %20 = arith.mulf %19, %19 : vector<32x128xf32>
    %cst_13 = arith.constant dense<0.000000e+00> : vector<128xf32>
    %21 = vector.multi_reduction <add>, %20, %cst_13 [0] : vector<32x128xf32> to vector<128xf32>
    %22 = vector.shape_cast %21 : vector<128xf32> to vector<1x128xf32>
    %c0_14 = arith.constant 0 : index
    %c0_15 = arith.constant 0 : index
    %23 = vector.load %arg7[%c0_14, %c0_15] : memref<128x8xf32, #tpu.memory_space<vmem>>, vector<128x8xf32>
    %cst_16 = arith.constant dense<0.000000e+00> : vector<1x8xf32>
    %24 = tpu.matmul %22, %23, %cst_16 {dimension_numbers = #tpu.dot_dimension_numbers<[1], [0], [0], [1], [0, 0, 1, 1], [], []>} : vector<1x128xf32>, vector<128x8xf32>, vector<1x8xf32> -> vector<1x8xf32>
    %cst_17 = arith.constant 0.001953125 : f32
    %25 = vector.broadcast %cst_17 : f32 to vector<1x8xf32>
    %26 = arith.mulf %24, %25 : vector<1x8xf32>
    %c0_18 = arith.constant 0 : index
    %c0_19 = arith.constant 0 : index
    %27 = vector.load %arg2[%c0_18, %c0_19] : memref<1x8xf32, #tpu.memory_space<vmem>>, vector<1x8xf32>
    %cst_20 = arith.constant 9.99999974E-6 : f32
    %28 = vector.broadcast %cst_20 : f32 to vector<1x8xf32>
    %29 = arith.addf %26, %28 : vector<1x8xf32>
    %30 = math.rsqrt %29 : vector<1x8xf32>
    %31 = arith.mulf %27, %30 : vector<1x8xf32>
    %c0_21 = arith.constant 0 : index
    %c0_22 = arith.constant 0 : index
    %32 = vector.load %arg8[%c0_21, %c0_22] : memref<8x128xf32, #tpu.memory_space<vmem>>, vector<8x128xf32>
    %cst_23 = arith.constant dense<0.000000e+00> : vector<1x128xf32>
    %33 = tpu.matmul %31, %32, %cst_23 {dimension_numbers = #tpu.dot_dimension_numbers<[1], [0], [0], [1], [0, 0, 1, 1], [], []>} : vector<1x8xf32>, vector<8x128xf32>, vector<1x128xf32> -> vector<1x128xf32>
    %c0_24 = arith.constant 0 : index
    %c0_25 = arith.constant 0 : index
    %34 = vector.load %arg3[%c0_24, %c0_25] : memref<1x8xf32, #tpu.memory_space<vmem>>, vector<1x8xf32>
    %c0_26 = arith.constant 0 : index
    %c0_27 = arith.constant 0 : index
    %35 = vector.load %arg8[%c0_26, %c0_27] : memref<8x128xf32, #tpu.memory_space<vmem>>, vector<8x128xf32>
    %cst_28 = arith.constant dense<0.000000e+00> : vector<1x128xf32>
    %36 = tpu.matmul %34, %35, %cst_28 {dimension_numbers = #tpu.dot_dimension_numbers<[1], [0], [0], [1], [0, 0, 1, 1], [], []>} : vector<1x8xf32>, vector<8x128xf32>, vector<1x128xf32> -> vector<1x128xf32>
    %37 = vector.broadcast %33 : vector<1x128xf32> to vector<32x128xf32>
    %38 = arith.mulf %19, %37 : vector<32x128xf32>
    %39 = vector.broadcast %36 : vector<1x128xf32> to vector<32x128xf32>
    %40 = arith.addf %38, %39 : vector<32x128xf32>
    %cst_29 = arith.constant 0.000000e+00 : f32
    %41 = vector.broadcast %cst_29 : f32 to vector<32x128xf32>
    %42 = arith.cmpf ogt, %40, %41 : vector<32x128xf32>
    %cst_30 = arith.constant 0.00999999977 : f32
    %43 = vector.broadcast %cst_30 : f32 to vector<32x128xf32>
    %44 = arith.mulf %43, %40 : vector<32x128xf32>
    %45 = arith.select %42, %40, %44 : vector<32x128xi1>, vector<32x128xf32>
    %46 = vector.shape_cast %45 : vector<32x128xf32> to vector<2x16x128xf32>
    %47 = vector.extract_strided_slice %46 {offsets = [0, 0, 0], sizes = [2, 15, 128], strides = [1, 1, 1]} : vector<2x16x128xf32> to vector<2x15x128xf32>
    %48 = tpu.concatenate %0, %47 in 1 : vector<2x1x128xf32>, vector<2x15x128xf32> -> vector<2x16x128xf32>
    %49 = vector.extract_strided_slice %46 {offsets = [0, 1, 0], sizes = [2, 15, 128], strides = [1, 1, 1]} : vector<2x16x128xf32> to vector<2x15x128xf32>
    %50 = tpu.concatenate %49, %0 in 1 : vector<2x15x128xf32>, vector<2x1x128xf32> -> vector<2x16x128xf32>
    %51 = tpu.concatenate %48, %46, %50 in 2 : vector<2x16x128xf32>, vector<2x16x128xf32>, vector<2x16x128xf32> -> vector<2x16x384xf32>
    %52 = vector.shape_cast %51 : vector<2x16x384xf32> to vector<32x384xf32>
    %c0_31 = arith.constant 0 : index
    %c0_32 = arith.constant 0 : index
    %53 = vector.load %arg4[%c0_31, %c0_32] : memref<384x128xf32, #tpu.memory_space<vmem>>, vector<384x128xf32>
    %cst_33 = arith.constant dense<0.000000e+00> : vector<32x128xf32>
    %54 = tpu.matmul %52, %53, %cst_33 {dimension_numbers = #tpu.dot_dimension_numbers<[1], [0], [0], [1], [0, 0, 1, 1], [], []>} : vector<32x384xf32>, vector<384x128xf32>, vector<32x128xf32> -> vector<32x128xf32>
    %cst_34 = arith.constant dense<0.000000e+00> : vector<128xf32>
    %55 = vector.multi_reduction <add>, %54, %cst_34 [0] : vector<32x128xf32> to vector<128xf32>
    %56 = vector.shape_cast %55 : vector<128xf32> to vector<1x128xf32>
    %c0_35 = arith.constant 0 : index
    %c0_36 = arith.constant 0 : index
    %57 = vector.load %arg7[%c0_35, %c0_36] : memref<128x8xf32, #tpu.memory_space<vmem>>, vector<128x8xf32>
    %cst_37 = arith.constant dense<0.000000e+00> : vector<1x8xf32>
    %58 = tpu.matmul %56, %57, %cst_37 {dimension_numbers = #tpu.dot_dimension_numbers<[1], [0], [0], [1], [0, 0, 1, 1], [], []>} : vector<1x128xf32>, vector<128x8xf32>, vector<1x8xf32> -> vector<1x8xf32>
    %cst_38 = arith.constant 0.001953125 : f32
    %59 = vector.broadcast %cst_38 : f32 to vector<1x8xf32>
    %60 = arith.mulf %58, %59 : vector<1x8xf32>
    %c0_39 = arith.constant 0 : index
    %c0_40 = arith.constant 0 : index
    %61 = vector.load %arg8[%c0_39, %c0_40] : memref<8x128xf32, #tpu.memory_space<vmem>>, vector<8x128xf32>
    %cst_41 = arith.constant dense<0.000000e+00> : vector<1x128xf32>
    %62 = tpu.matmul %60, %61, %cst_41 {dimension_numbers = #tpu.dot_dimension_numbers<[1], [0], [0], [1], [0, 0, 1, 1], [], []>} : vector<1x8xf32>, vector<8x128xf32>, vector<1x128xf32> -> vector<1x128xf32>
    %63 = vector.broadcast %62 : vector<1x128xf32> to vector<32x128xf32>
    %64 = arith.subf %54, %63 : vector<32x128xf32>
    %65 = arith.mulf %64, %64 : vector<32x128xf32>
    %cst_42 = arith.constant dense<0.000000e+00> : vector<128xf32>
    %66 = vector.multi_reduction <add>, %65, %cst_42 [0] : vector<32x128xf32> to vector<128xf32>
    %67 = vector.shape_cast %66 : vector<128xf32> to vector<1x128xf32>
    %c0_43 = arith.constant 0 : index
    %c0_44 = arith.constant 0 : index
    %68 = vector.load %arg7[%c0_43, %c0_44] : memref<128x8xf32, #tpu.memory_space<vmem>>, vector<128x8xf32>
    %cst_45 = arith.constant dense<0.000000e+00> : vector<1x8xf32>
    %69 = tpu.matmul %67, %68, %cst_45 {dimension_numbers = #tpu.dot_dimension_numbers<[1], [0], [0], [1], [0, 0, 1, 1], [], []>} : vector<1x128xf32>, vector<128x8xf32>, vector<1x8xf32> -> vector<1x8xf32>
    %cst_46 = arith.constant 0.001953125 : f32
    %70 = vector.broadcast %cst_46 : f32 to vector<1x8xf32>
    %71 = arith.mulf %69, %70 : vector<1x8xf32>
    %c0_47 = arith.constant 0 : index
    %c0_48 = arith.constant 0 : index
    %72 = vector.load %arg5[%c0_47, %c0_48] : memref<1x8xf32, #tpu.memory_space<vmem>>, vector<1x8xf32>
    %cst_49 = arith.constant 9.99999974E-6 : f32
    %73 = vector.broadcast %cst_49 : f32 to vector<1x8xf32>
    %74 = arith.addf %71, %73 : vector<1x8xf32>
    %75 = math.rsqrt %74 : vector<1x8xf32>
    %76 = arith.mulf %72, %75 : vector<1x8xf32>
    %c0_50 = arith.constant 0 : index
    %c0_51 = arith.constant 0 : index
    %77 = vector.load %arg8[%c0_50, %c0_51] : memref<8x128xf32, #tpu.memory_space<vmem>>, vector<8x128xf32>
    %cst_52 = arith.constant dense<0.000000e+00> : vector<1x128xf32>
    %78 = tpu.matmul %76, %77, %cst_52 {dimension_numbers = #tpu.dot_dimension_numbers<[1], [0], [0], [1], [0, 0, 1, 1], [], []>} : vector<1x8xf32>, vector<8x128xf32>, vector<1x128xf32> -> vector<1x128xf32>
    %c0_53 = arith.constant 0 : index
    %c0_54 = arith.constant 0 : index
    %79 = vector.load %arg6[%c0_53, %c0_54] : memref<1x8xf32, #tpu.memory_space<vmem>>, vector<1x8xf32>
    %c0_55 = arith.constant 0 : index
    %c0_56 = arith.constant 0 : index
    %80 = vector.load %arg8[%c0_55, %c0_56] : memref<8x128xf32, #tpu.memory_space<vmem>>, vector<8x128xf32>
    %cst_57 = arith.constant dense<0.000000e+00> : vector<1x128xf32>
    %81 = tpu.matmul %79, %80, %cst_57 {dimension_numbers = #tpu.dot_dimension_numbers<[1], [0], [0], [1], [0, 0, 1, 1], [], []>} : vector<1x8xf32>, vector<8x128xf32>, vector<1x128xf32> -> vector<1x128xf32>
    %82 = vector.broadcast %78 : vector<1x128xf32> to vector<32x128xf32>
    %83 = arith.mulf %64, %82 : vector<32x128xf32>
    %84 = vector.broadcast %81 : vector<1x128xf32> to vector<32x128xf32>
    %85 = arith.addf %83, %84 : vector<32x128xf32>
    %86 = vector.shape_cast %1 : vector<2x16x128xf32> to vector<32x128xf32>
    %87 = arith.addf %85, %86 : vector<32x128xf32>
    %88 = vector.shape_cast %87 : vector<32x128xf32> to vector<2x16x128xf32>
    %c0_58 = arith.constant 0 : index
    %c0_59 = arith.constant 0 : index
    %c0_60 = arith.constant 0 : index
    %89 = vector.load %arg9[%c0_58, %c0_59, %c0_60] : memref<2x16x128xf32, #tpu.memory_space<vmem>>, vector<2x16x128xf32>
    tpu.vector_store %arg9[%c0_58, %c0_59, %c0_60], %88 {strides = array<i32>} : memref<2x16x128xf32, #tpu.memory_space<vmem>>, vector<2x16x128xf32>,
    return
  }
}

</mosaic_0001>

<llo_original>
// kernel: tpu_custom_call.1
$region0: #{tpu_custom_call.1}
  #allocation0 [shape = 'u32[]', space=smem, size = 0x4, offset = 0x4, fixed_abs, tag = 'smem constant byte address 0x4 - core index']
  #allocation1 [shape = 'u32[144,128]{1,0:T(1,128)}', space=vmem, size = 0x12000, scoped, tag = 'internal scratch']
  %s0 = inlined_call_operand.vmem [shape: f32[2,16,128], index: 0, kind: input, shape index: {}]
  %s1 = inlined_call_operand.hbm [shape: f32[384,128], index: 1, kind: input, shape index: {}]
  %s2 = inlined_call_operand.vmem [shape: f32[1,8], index: 2, kind: input, shape index: {}]
  %s3 = inlined_call_operand.vmem [shape: f32[1,8], index: 3, kind: input, shape index: {}]
  %s4 = inlined_call_operand.hbm [shape: f32[384,128], index: 4, kind: input, shape index: {}]
  %s5 = inlined_call_operand.vmem [shape: f32[1,8], index: 5, kind: input, shape index: {}]
  %s6 = inlined_call_operand.vmem [shape: f32[1,8], index: 6, kind: input, shape index: {}]
  %s7 = inlined_call_operand.vmem [shape: f32[128,8], index: 7, kind: input, shape index: {}]
  %s8 = inlined_call_operand.vmem [shape: f32[8,128], index: 8, kind: input, shape index: {}]
  %s9 = inlined_call_operand.hbm [shape: f32[2,16,128], index: 9, kind: output, shape index: {}]
  %s10 = sld [smem:[#allocation0]]
  $region54: #{tpu_custom_call.1} parent=0
    _
  %s12 = ssub.s32 1, %s10
  %s13 = scalar_select 0, %s12, %s10
  $region1: #{tpu_custom_call.1} parent=0
    #allocation2 [shape = 'u8[196608]{0}', space=vmem, size = 0x30000, scoped, tag = 'input window, operand 1, single buffered']
    #allocation3 [shape = 's32[1]{0}', space=sflag, size = 0x4, scoped, tag = 'scoped memory for tpu_custom_call.1']
    #allocation4 [shape = 's32[1]{0}', space=sflag, size = 0x4, scoped, tag = 'scoped memory for tpu_custom_call.1']
    #allocation5 [shape = 'u8[196608]{0}', space=vmem, size = 0x30000, scoped, tag = 'input window, operand 4, single buffered']
    #allocation6 [shape = 's32[1]{0}', space=sflag, size = 0x4, scoped, tag = 'scoped memory for tpu_custom_call.1']
    #allocation7 [shape = 'u8[16384]{0}', space=vmem, size = 0x4000, scoped, tag = 'output window, operand 0, single buffered']
    %14 = vsyncpa [#allocation3], 0
    %15 = vsyncpa [#allocation6], 0
    %16 = vsyncpa [#allocation4], 0
    // Predicated region
    $region2: #{tpu_custom_call.1} parent=1 // pred_check
      _
    $region3: #{tpu_custom_call.1} parent=1 // pred_check_branch
      %18 = sbr.rel (0) target = $region5
    $region4: #{tpu_custom_call.1} parent=1 // pred_region
      _
    $region5: #{tpu_custom_call.1} parent=1 // pred_fallthru
      _
    // Predicated region
    $region6: #{tpu_custom_call.1} parent=1 // pred_check
      _
    $region7: #{tpu_custom_call.1} parent=1 // pred_check_branch
      %20 = sbr.rel (0) target = $region9
    $region8: #{tpu_custom_call.1} parent=1 // pred_region
      %s22 = ssub.s32 6144, 6144
      %23 = vsyncadd [#allocation3], %s22
      %s24 = sshll.u32 [#allocation2], 4
      %s25 = int_to_ptr.vmem [resolvable:$true] %s24
      %30 = dma.hbm_to_vmem [thread:$0]  %s1, 6144, %s25, [#allocation3], 128, 128, 8
    $region9: #{tpu_custom_call.1} parent=1 // pred_fallthru
      _
    // Predicated region
    $region10: #{tpu_custom_call.1} parent=1 // pred_check
      _
    $region11: #{tpu_custom_call.1} parent=1 // pred_check_branch
      %32 = sbr.rel (0) target = $region13
    $region12: #{tpu_custom_call.1} parent=1 // pred_region
      _
    $region13: #{tpu_custom_call.1} parent=1 // pred_fallthru
      _
    // Predicated region
    $region14: #{tpu_custom_call.1} parent=1 // pred_check
      _
    $region15: #{tpu_custom_call.1} parent=1 // pred_check_branch
      %34 = sbr.rel (0) target = $region17
    $region16: #{tpu_custom_call.1} parent=1 // pred_region
      _
    $region17: #{tpu_custom_call.1} parent=1 // pred_fallthru
      _
    // Predicated region
    $region18: #{tpu_custom_call.1} parent=1 // pred_check
      _
    $region19: #{tpu_custom_call.1} parent=1 // pred_check_branch
      %36 = sbr.rel (0) target = $region21
    $region20: #{tpu_custom_call.1} parent=1 // pred_region
      %s38 = ssub.s32 6144, 6144
      %39 = vsyncadd [#allocation6], %s38
      %s40 = sshll.u32 [#allocation5], 4
      %s41 = int_to_ptr.vmem [resolvable:$true] %s40
      %46 = dma.hbm_to_vmem [thread:$0]  %s4, 6144, %s41, [#allocation6], 128, 128, 8
    $region21: #{tpu_custom_call.1} parent=1 // pred_fallthru
      _
    // Predicated region
    $region22: #{tpu_custom_call.1} parent=1 // pred_check
      _
    $region23: #{tpu_custom_call.1} parent=1 // pred_check_branch
      %48 = sbr.rel (0) target = $region25
    $region24: #{tpu_custom_call.1} parent=1 // pred_region
      _
    $region25: #{tpu_custom_call.1} parent=1 // pred_fallthru
      _
    // Predicated region
    $region26: #{tpu_custom_call.1} parent=1 // pred_check
      _
    $region27: #{tpu_custom_call.1} parent=1 // pred_check_branch
      %50 = sbr.rel (0) target = $region29
    $region28: #{tpu_custom_call.1} parent=1 // pred_region
      _
    $region29: #{tpu_custom_call.1} parent=1 // pred_fallthru
      _
    // Predicated region
    $region30: #{tpu_custom_call.1} parent=1 // pred_check
      _
    $region31: #{tpu_custom_call.1} parent=1 // pred_check_branch
      %52 = sbr.rel (0) target = $region33
    $region32: #{tpu_custom_call.1} parent=1 // pred_region
      _
    $region33: #{tpu_custom_call.1} parent=1 // pred_fallthru
      _
    // Predicated region
    $region34: #{tpu_custom_call.1} parent=1 // pred_check
      _
    $region35: #{tpu_custom_call.1} parent=1 // pred_check_branch
      %54 = sbr.rel (0) target = $region37
    $region36: #{tpu_custom_call.1} parent=1 // pred_region
      _
    $region37: #{tpu_custom_call.1} parent=1 // pred_fallthru
      _
    // Predicated region
    $region38: #{tpu_custom_call.1} parent=1 // pred_check
      _
    $region39: #{tpu_custom_call.1} parent=1 // pred_check_branch
      %56 = sbr.rel (0) target = $region41
    $region40: #{tpu_custom_call.1} parent=1 // pred_region
      %57 = dma.done [#allocation3], 6144
    $region41: #{tpu_custom_call.1} parent=1 // pred_fallthru
      _
    // Predicated region
    $region42: #{tpu_custom_call.1} parent=1 // pred_check
      _
    $region43: #{tpu_custom_call.1} parent=1 // pred_check_branch
      %59 = sbr.rel (0) target = $region45
    $region44: #{tpu_custom_call.1} parent=1 // pred_region
      %60 = dma.done [#allocation6], 6144
    $region45: #{tpu_custom_call.1} parent=1 // pred_fallthru
      _
    %v61 = vld [vmem:[%s0] sm:$0xff]
    %v62 = vld [vmem:[%s0 + $0x8] sm:$0xff]
    %v63 = vld [vmem:[%s0 + $0x10] sm:$0xff]
    %v64 = vld [vmem:[%s0 + $0x18] sm:$0xff]
    %vm69 = vcmask 1040384
    %v70 = vrot.slane %v61, 7
    %v71 = vrot.slane %v62, 7
    %v72 = vsel %vm69, %v70, %v71
    %v73 = vrot.slane %v63, 7
    %v74 = vrot.slane %v64, 7
    %v75 = vsel %vm69, %v73, %v74
    %v80 = vsel %vm69, 0.0, %v70
    %v81 = vsel %vm69, 0.0, %v73
    %vm82 = vcmask 1046528
    %v83 = vrot.slane %v61, 1
    %v84 = vrot.slane %v62, 1
    %v85 = vsel %vm82, %v83, %v84
    %v86 = vrot.slane %v63, 1
    %v87 = vrot.slane %v64, 1
    %v88 = vsel %vm82, %v86, %v87
    %v93 = vsel %vm82, %v84, 0.0
    %v94 = vsel %vm82, %v87, 0.0
    %v95 = vld [vmem:[#allocation2] sm:$0xff]
    %v96 = vld [vmem:[#allocation2 + $0x8] sm:$0xff]
    %v97 = vld [vmem:[#allocation2 + $0x10] sm:$0xff]
    %v98 = vld [vmem:[#allocation2 + $0x18] sm:$0xff]
    %v99 = vld [vmem:[#allocation2 + $0x20] sm:$0xff]
    %v100 = vld [vmem:[#allocation2 + $0x28] sm:$0xff]
    %v101 = vld [vmem:[#allocation2 + $0x30] sm:$0xff]
    %v102 = vld [vmem:[#allocation2 + $0x38] sm:$0xff]
    %v103 = vld [vmem:[#allocation2 + $0x40] sm:$0xff]
    %v104 = vld [vmem:[#allocation2 + $0x48] sm:$0xff]
    %v105 = vld [vmem:[#allocation2 + $0x50] sm:$0xff]
    %v106 = vld [vmem:[#allocation2 + $0x58] sm:$0xff]
    %v107 = vld [vmem:[#allocation2 + $0x60] sm:$0xff]
    %v108 = vld [vmem:[#allocation2 + $0x68] sm:$0xff]
    %v109 = vld [vmem:[#allocation2 + $0x70] sm:$0xff]
    %v110 = vld [vmem:[#allocation2 + $0x78] sm:$0xff]
    %v111 = vld [vmem:[#allocation2 + $0x80] sm:$0xff]
    %v112 = vld [vmem:[#allocation2 + $0x88] sm:$0xff]
    %v113 = vld [vmem:[#allocation2 + $0x90] sm:$0xff]
    %v114 = vld [vmem:[#allocation2 + $0x98] sm:$0xff]
    %v115 = vld [vmem:[#allocation2 + $0xa0] sm:$0xff]
    %v116 = vld [vmem:[#allocation2 + $0xa8] sm:$0xff]
    %v117 = vld [vmem:[#allocation2 + $0xb0] sm:$0xff]
    %v118 = vld [vmem:[#allocation2 + $0xb8] sm:$0xff]
    %v119 = vld [vmem:[#allocation2 + $0xc0] sm:$0xff]
    %v120 = vld [vmem:[#allocation2 + $0xc8] sm:$0xff]
    %v121 = vld [vmem:[#allocation2 + $0xd0] sm:$0xff]
    %v122 = vld [vmem:[#allocation2 + $0xd8] sm:$0xff]
    %v123 = vld [vmem:[#allocation2 + $0xe0] sm:$0xff]
    %v124 = vld [vmem:[#allocation2 + $0xe8] sm:$0xff]
    %v125 = vld [vmem:[#allocation2 + $0xf0] sm:$0xff]
    %v126 = vld [vmem:[#allocation2 + $0xf8] sm:$0xff]
    %v127 = vld [vmem:[#allocation2 + $0x100] sm:$0xff]
    %v128 = vld [vmem:[#allocation2 + $0x108] sm:$0xff]
    %v129 = vld [vmem:[#allocation2 + $0x110] sm:$0xff]
    %v130 = vld [vmem:[#allocation2 + $0x118] sm:$0xff]
    %v131 = vld [vmem:[#allocation2 + $0x120] sm:$0xff]
    %v132 = vld [vmem:[#allocation2 + $0x128] sm:$0xff]
    %v133 = vld [vmem:[#allocation2 + $0x130] sm:$0xff]
    %v134 = vld [vmem:[#allocation2 + $0x138] sm:$0xff]
    %v135 = vld [vmem:[#allocation2 + $0x140] sm:$0xff]
    %v136 = vld [vmem:[#allocation2 + $0x148] sm:$0xff]
    %v137 = vld [vmem:[#allocation2 + $0x150] sm:$0xff]
    %v138 = vld [vmem:[#allocation2 + $0x158] sm:$0xff]
    %v139 = vld [vmem:[#allocation2 + $0x160] sm:$0xff]
    %v140 = vld [vmem:[#allocation2 + $0x168] sm:$0xff]
    %v141 = vld [vmem:[#allocation2 + $0x170] sm:$0xff]
    %v142 = vld [vmem:[#allocation2 + $0x178] sm:$0xff]
    %143 = vmatprep.subr.mxu0 0.0
    %144 = vmatpush1.msra.mxu0 %v95
    %145 = vmatprep.subr.mxu0 0.0
    %146 = vmatpush1.msra.mxu0 %v96
    %147 = vmatprep.subr.mxu0 0.0
    %148 = vmatpush1.msra.mxu0 %v97
    %149 = vmatprep.subr.mxu0 0.0
    %150 = vmatpush1.msra.mxu0 %v98
    %151 = vmatprep.subr.mxu0 0.0
    %152 = vmatpush1.msra.mxu0 %v99
    %153 = vmatprep.subr.mxu0 0.0
    %154 = vmatpush1.msra.mxu0 %v100
    %155 = vmatprep.subr.mxu0 0.0
    %156 = vmatpush1.msra.mxu0 %v101
    %157 = vmatprep.subr.mxu0 0.0
    %158 = vmatpush1.msra.mxu0 %v102
    %159 = vmatprep.subr.mxu0 0.0
    %160 = vmatpush1.msra.mxu0 %v103
    %161 = vmatprep.subr.mxu0 0.0
    %162 = vmatpush1.msra.mxu0 %v104
    %163 = vmatprep.subr.mxu0 0.0
    %164 = vmatpush1.msra.mxu0 %v105
    %165 = vmatprep.subr.mxu0 0.0
    %166 = vmatpush1.msra.mxu0 %v106
    %167 = vmatprep.subr.mxu0 0.0
    %168 = vmatpush1.msra.mxu0 %v107
    %169 = vmatprep.subr.mxu0 0.0
    %170 = vmatpush1.msra.mxu0 %v108
    %171 = vmatprep.subr.mxu0 0.0
    %172 = vmatpush1.msra.mxu0 %v109
    %173 = vmatprep.subr.mxu0 0.0
    %174 = vmatpush1.msra.mxu0 %v110
    %175 = vmatprep.subr.mxu0 0.0
    %176 = vmatpush1.msra.mxu0 %v111
    %177 = vmatprep.subr.mxu0 0.0
    %178 = vmatpush1.msra.mxu0 %v112
    %179 = vmatprep.subr.mxu0 0.0
    %180 = vmatpush1.msra.mxu0 %v113
    %181 = vmatprep.subr.mxu0 0.0
    %182 = vmatpush1.msra.mxu0 %v114
    %183 = vmatprep.subr.mxu0 0.0
    %184 = vmatpush1.msra.mxu0 %v115
    %185 = vmatprep.subr.mxu0 0.0
    %186 = vmatpush1.msra.mxu0 %v116
    %187 = vmatprep.subr.mxu0 0.0
    %188 = vmatpush1.msra.mxu0 %v117
    %189 = vmatprep.subr.mxu0 0.0
    %190 = vmatpush1.msra.mxu0 %v118
    %191 = vmatprep.subr.mxu0 0.0
    %192 = vmatpush1.msra.mxu0 %v119
    %193 = vmatprep.subr.mxu0 0.0
    %194 = vmatpush1.msra.mxu0 %v120
    %195 = vmatprep.subr.mxu0 0.0
    %196 = vmatpush1.msra.mxu0 %v121
    %197 = vmatprep.subr.mxu0 0.0
    %198 = vmatpush1.msra.mxu0 %v122
    %199 = vmatprep.subr.mxu0 0.0
    %200 = vmatpush1.msra.mxu0 %v123
    %201 = vmatprep.subr.mxu0 0.0
    %202 = vmatpush1.msra.mxu0 %v124
    %203 = vmatprep.subr.mxu0 0.0
    %204 = vmatpush1.msra.mxu0 %v125
    %205 = vmatprep.subr.mxu0 0.0
    %206 = vmatpush1.msra.mxu0 %v126
    %207 = vmatprep.mubr.f32.mxu0 %v61
    %208 = vmatmul.mubr.f32.gmra.mrb[0].mxu0 %v80
    %v209 = vpop.f32.mrb[0].mxu0
    %v210 = vadd.f32 0.0, %v209
    %v211 = vpop.f32.mrb[0].mxu0
    %212 = vmatprep.mubr.f32.mxu0 %v62
    %213 = vmatmul.mubr.f32.gmra.mrb[0].mxu0 %v72
    %v214 = vpop.f32.mrb[0].mxu0
    %v215 = vadd.f32 0.0, %v214
    %v216 = vpop.f32.mrb[0].mxu0
    %217 = vmatprep.mubr.f32.mxu0 %v63
    %218 = vmatmul.mubr.f32.gmra.mrb[0].mxu0 %v81
    %v219 = vpop.f32.mrb[0].mxu0
    %v220 = vadd.f32 0.0, %v219
    %v221 = vpop.f32.mrb[0].mxu0
    %222 = vmatprep.mubr.f32.mxu0 %v64
    %223 = vmatmul.mubr.f32.gmra.mrb[0].mxu0 %v75
    %v224 = vpop.f32.mrb[0].mxu0
    %v225 = vadd.f32 0.0, %v224
    %v226 = vpop.f32.mrb[0].mxu0
    %227 = vdwg.mxu0
    %228 = vmatprep.subr.mxu0 0.0
    %229 = vmatpush1.msra.mxu0 %v127
    %230 = vmatprep.subr.mxu0 0.0
    %231 = vmatpush1.msra.mxu0 %v128
    %232 = vmatprep.subr.mxu0 0.0
    %233 = vmatpush1.msra.mxu0 %v129
    %234 = vmatprep.subr.mxu0 0.0
    %235 = vmatpush1.msra.mxu0 %v130
    %236 = vmatprep.subr.mxu0 0.0
    %237 = vmatpush1.msra.mxu0 %v131
    %238 = vmatprep.subr.mxu0 0.0
    %239 = vmatpush1.msra.mxu0 %v132
    %240 = vmatprep.subr.mxu0 0.0
    %241 = vmatpush1.msra.mxu0 %v133
    %242 = vmatprep.subr.mxu0 0.0
    %243 = vmatpush1.msra.mxu0 %v134
    %244 = vmatprep.subr.mxu0 0.0
    %245 = vmatpush1.msra.mxu0 %v135
    %246 = vmatprep.subr.mxu0 0.0
    %247 = vmatpush1.msra.mxu0 %v136
    %248 = vmatprep.subr.mxu0 0.0
    %249 = vmatpush1.msra.mxu0 %v137
    %250 = vmatprep.subr.mxu0 0.0
    %251 = vmatpush1.msra.mxu0 %v138
    %252 = vmatprep.subr.mxu0 0.0
    %253 = vmatpush1.msra.mxu0 %v139
    %254 = vmatprep.subr.mxu0 0.0
    %255 = vmatpush1.msra.mxu0 %v140
    %256 = vmatprep.subr.mxu0 0.0
    %257 = vmatpush1.msra.mxu0 %v141
    %258 = vmatprep.subr.mxu0 0.0
    %259 = vmatpush1.msra.mxu0 %v142
    %260 = vmatprep.subr.mxu0 0.0
    %261 = vmatpush1.msra.mxu0 0.0
    %262 = vmatprep.subr.mxu0 0.0
    %263 = vmatpush1.msra.mxu0 0.0
    %264 = vmatprep.subr.mxu0 0.0
    %265 = vmatpush1.msra.mxu0 0.0
    %266 = vmatprep.subr.mxu0 0.0
    %267 = vmatpush1.msra.mxu0 0.0
    %268 = vmatprep.subr.mxu0 0.0
    %269 = vmatpush1.msra.mxu0 0.0
    %270 = vmatprep.subr.mxu0 0.0
    %271 = vmatpush1.msra.mxu0 0.0
    %272 = vmatprep.subr.mxu0 0.0
    %273 = vmatpush1.msra.mxu0 0.0
    %274 = vmatprep.subr.mxu0 0.0
    %275 = vmatpush1.msra.mxu0 0.0
    %276 = vmatprep.subr.mxu0 0.0
    %277 = vmatpush1.msra.mxu0 0.0
    %278 = vmatprep.subr.mxu0 0.0
    %279 = vmatpush1.msra.mxu0 0.0
    %280 = vmatprep.subr.mxu0 0.0
    %281 = vmatpush1.msra.mxu0 0.0
    %282 = vmatprep.subr.mxu0 0.0
    %283 = vmatpush1.msra.mxu0 0.0
    %284 = vmatprep.subr.mxu0 0.0
    %285 = vmatpush1.msra.mxu0 0.0
    %286 = vmatprep.subr.mxu0 0.0
    %287 = vmatpush1.msra.mxu0 0.0
    %288 = vmatprep.subr.mxu0 0.0
    %289 = vmatpush1.msra.mxu0 0.0
    %290 = vmatprep.subr.mxu0 0.0
    %291 = vmatpush1.msra.mxu0 0.0
    %292 = vmatprep.mubr.f32.mxu0 0.0
    %293 = vmatmul.mubr.f32.gmra.mrb[0].mxu0 %v85
    %v294 = vpop.f32.mrb[0].mxu0
    %v295 = vadd.f32 %v210, %v294
    %v296 = vpop.f32.mrb[0].mxu0
    %297 = vmatprep.mubr.f32.mxu0 0.0
    %298 = vmatmul.mubr.f32.gmra.mrb[0].mxu0 %v93
    %v299 = vpop.f32.mrb[0].mxu0
    %v300 = vadd.f32 %v215, %v299
    %v301 = vpop.f32.mrb[0].mxu0
    %302 = vmatprep.mubr.f32.mxu0 0.0
    %303 = vmatmul.mubr.f32.gmra.mrb[0].mxu0 %v88
    %v304 = vpop.f32.mrb[0].mxu0
    %v305 = vadd.f32 %v220, %v304
    %v306 = vpop.f32.mrb[0].mxu0
    %307 = vmatprep.mubr.f32.mxu0 0.0
    %308 = vmatmul.mubr.f32.gmra.mrb[0].mxu0 %v94
    %v309 = vpop.f32.mrb[0].mxu0
    %v310 = vadd.f32 %v225, %v309
    %v311 = vpop.f32.mrb[0].mxu0
    %312 = vdwg.mxu0
    %v313 = vadd.f32 %v295, %v300
    %v314 = vadd.f32 %v313, %v305
    %v315 = vadd.f32 %v314, %v310
    %v316 = vrot.slane %v315, 4
    %v317 = vadd.f32 %v315, %v316
    %v318 = vrot.slane %v317, 2
    %v319 = vadd.f32 %v317, %v318
    %v320 = vrot.slane %v319, 1
    %v321 = vadd.f32 %v319, %v320
    %v322 = vld [vmem:[%s7] sm:$0xff]
    %v323 = vld [vmem:[%s7 + $0x8] sm:$0xff]
    %v324 = vld [vmem:[%s7 + $0x10] sm:$0xff]
    %v325 = vld [vmem:[%s7 + $0x18] sm:$0xff]
    %v326 = vld [vmem:[%s7 + $0x20] sm:$0xff]
    %v327 = vld [vmem:[%s7 + $0x28] sm:$0xff]
    %v328 = vld [vmem:[%s7 + $0x30] sm:$0xff]
    %v329 = vld [vmem:[%s7 + $0x38] sm:$0xff]
    %v330 = vld [vmem:[%s7 + $0x40] sm:$0xff]
    %v331 = vld [vmem:[%s7 + $0x48] sm:$0xff]
    %v332 = vld [vmem:[%s7 + $0x50] sm:$0xff]
    %v333 = vld [vmem:[%s7 + $0x58] sm:$0xff]
    %v334 = vld [vmem:[%s7 + $0x60] sm:$0xff]
    %v335 = vld [vmem:[%s7 + $0x68] sm:$0xff]
    %v336 = vld [vmem:[%s7 + $0x70] sm:$0xff]
    %v337 = vld [vmem:[%s7 + $0x78] sm:$0xff]
    %338 = vmatprep.subr.mxu0 0.0
    %339 = vmatpush1.msra.mxu0 %v322
    %340 = vmatprep.subr.mxu0 0.0
    %341 = vmatpush1.msra.mxu0 %v323
    %342 = vmatprep.subr.mxu0 0.0
    %343 = vmatpush1.msra.mxu0 %v324
    %344 = vmatprep.subr.mxu0 0.0
    %345 = vmatpush1.msra.mxu0 %v325
    %346 = vmatprep.subr.mxu0 0.0
    %347 = vmatpush1.msra.mxu0 %v326
    %348 = vmatprep.subr.mxu0 0.0
    %349 = vmatpush1.msra.mxu0 %v327
    %350 = vmatprep.subr.mxu0 0.0
    %351 = vmatpush1.msra.mxu0 %v328
    %352 = vmatprep.subr.mxu0 0.0
    %353 = vmatpush1.msra.mxu0 %v329
    %354 = vmatprep.subr.mxu0 0.0
    %355 = vmatpush1.msra.mxu0 %v330
    %356 = vmatprep.subr.mxu0 0.0
    %357 = vmatpush1.msra.mxu0 %v331
    %358 = vmatprep.subr.mxu0 0.0
    %359 = vmatpush1.msra.mxu0 %v332
    %360 = vmatprep.subr.mxu0 0.0
    %361 = vmatpush1.msra.mxu0 %v333
    %362 = vmatprep.subr.mxu0 0.0
    %363 = vmatpush1.msra.mxu0 %v334
    %364 = vmatprep.subr.mxu0 0.0
    %365 = vmatpush1.msra.mxu0 %v335
    %366 = vmatprep.subr.mxu0 0.0
    %367 = vmatpush1.msra.mxu0 %v336
    %368 = vmatprep.subr.mxu0 0.0
    %369 = vmatpush1.msra.mxu0 %v337
    %370 = vmatprep.subr.mxu0 0.0
    %371 = vmatpush1.msra.mxu0 0.0
    %372 = vmatprep.subr.mxu0 0.0
    %373 = vmatpush1.msra.mxu0 0.0
    %374 = vmatprep.subr.mxu0 0.0
    %375 = vmatpush1.msra.mxu0 0.0
    %376 = vmatprep.subr.mxu0 0.0
    %377 = vmatpush1.msra.mxu0 0.0
    %378 = vmatprep.subr.mxu0 0.0
    %379 = vmatpush1.msra.mxu0 0.0
    %380 = vmatprep.subr.mxu0 0.0
    %381 = vmatpush1.msra.mxu0 0.0
    %382 = vmatprep.subr.mxu0 0.0
    %383 = vmatpush1.msra.mxu0 0.0
    %384 = vmatprep.subr.mxu0 0.0
    %385 = vmatpush1.msra.mxu0 0.0
    %386 = vmatprep.subr.mxu0 0.0
    %387 = vmatpush1.msra.mxu0 0.0
    %388 = vmatprep.subr.mxu0 0.0
    %389 = vmatpush1.msra.mxu0 0.0
    %390 = vmatprep.subr.mxu0 0.0
    %391 = vmatpush1.msra.mxu0 0.0
    %392 = vmatprep.subr.mxu0 0.0
    %393 = vmatpush1.msra.mxu0 0.0
    %394 = vmatprep.subr.mxu0 0.0
    %395 = vmatpush1.msra.mxu0 0.0
    %396 = vmatprep.subr.mxu0 0.0
    %397 = vmatpush1.msra.mxu0 0.0
    %398 = vmatprep.subr.mxu0 0.0
    %399 = vmatpush1.msra.mxu0 0.0
    %400 = vmatprep.subr.mxu0 0.0
    %401 = vmatpush1.msra.mxu0 0.0
    %402 = vmatprep.mubr.f32.mxu0 0.0
    %403 = vmatmul.mubr.f32.gmra.mrb[0].mxu0 %v321
    %v404 = vpop.f32.mrb[0].mxu0
    %v405 = vadd.f32 0.0, %v404
    %v406 = vpop.f32.mrb[0].mxu0
    %407 = vdwg.mxu0
    %v408 = vmul.f32 %v405, 0.001953125
    %v409 = vld [vmem:[%s8] sm:$0xff]
    %vm410 = vcmask 64512
    %v412 = vsel %vm410, %v408, 0
    %414 = vmatprep.subr.mxu0 0.0
    %415 = vmatpush1.msra.mxu0 %v409
    %416 = vmatprep.subr.mxu0 0.0
    %417 = vmatpush1.msra.mxu0 0.0
    %418 = vmatprep.subr.mxu0 0.0
    %419 = vmatpush1.msra.mxu0 0.0
    %420 = vmatprep.subr.mxu0 0.0
    %421 = vmatpush1.msra.mxu0 0.0
    %422 = vmatprep.subr.mxu0 0.0
    %423 = vmatpush1.msra.mxu0 0.0
    %424 = vmatprep.subr.mxu0 0.0
    %425 = vmatpush1.msra.mxu0 0.0
    %426 = vmatprep.subr.mxu0 0.0
    %427 = vmatpush1.msra.mxu0 0.0
    %428 = vmatprep.subr.mxu0 0.0
    %429 = vmatpush1.msra.mxu0 0.0
    %430 = vmatprep.subr.mxu0 0.0
    %431 = vmatpush1.msra.mxu0 0.0
    %432 = vmatprep.subr.mxu0 0.0
    %433 = vmatpush1.msra.mxu0 0.0
    %434 = vmatprep.subr.mxu0 0.0
    %435 = vmatpush1.msra.mxu0 0.0
    %436 = vmatprep.subr.mxu0 0.0
    %437 = vmatpush1.msra.mxu0 0.0
    %438 = vmatprep.subr.mxu0 0.0
    %439 = vmatpush1.msra.mxu0 0.0
    %440 = vmatprep.subr.mxu0 0.0
    %441 = vmatpush1.msra.mxu0 0.0
    %442 = vmatprep.subr.mxu0 0.0
    %443 = vmatpush1.msra.mxu0 0.0
    %444 = vmatprep.subr.mxu0 0.0
    %445 = vmatpush1.msra.mxu0 0.0
    %446 = vmatprep.subr.mxu0 0.0
    %447 = vmatpush1.msra.mxu0 0.0
    %448 = vmatprep.subr.mxu0 0.0
    %449 = vmatpush1.msra.mxu0 0.0
    %450 = vmatprep.subr.mxu0 0.0
    %451 = vmatpush1.msra.mxu0 0.0
    %452 = vmatprep.subr.mxu0 0.0
    %453 = vmatpush1.msra.mxu0 0.0
    %454 = vmatprep.subr.mxu0 0.0
    %455 = vmatpush1.msra.mxu0 0.0
    %456 = vmatprep.subr.mxu0 0.0
    %457 = vmatpush1.msra.mxu0 0.0
    %458 = vmatprep.subr.mxu0 0.0
    %459 = vmatpush1.msra.mxu0 0.0
    %460 = vmatprep.subr.mxu0 0.0
    %461 = vmatpush1.msra.mxu0 0.0
    %462 = vmatprep.subr.mxu0 0.0
    %463 = vmatpush1.msra.mxu0 0.0
    %464 = vmatprep.subr.mxu0 0.0
    %465 = vmatpush1.msra.mxu0 0.0
    %466 = vmatprep.subr.mxu0 0.0
    %467 = vmatpush1.msra.mxu0 0.0
    %468 = vmatprep.subr.mxu0 0.0
    %469 = vmatpush1.msra.mxu0 0.0
    %470 = vmatprep.subr.mxu0 0.0
    %471 = vmatpush1.msra.mxu0 0.0
    %472 = vmatprep.subr.mxu0 0.0
    %473 = vmatpush1.msra.mxu0 0.0
    %474 = vmatprep.subr.mxu0 0.0
    %475 = vmatpush1.msra.mxu0 0.0
    %476 = vmatprep.subr.mxu0 0.0
    %477 = vmatpush1.msra.mxu0 0.0
    %478 = vmatprep.mubr.f32.mxu0 0.0
    %479 = vmatmul.mubr.f32.gmra.mrb[0].mxu0 %v412
    %v480 = vpop.f32.mrb[0].mxu0
    %v481 = vadd.f32 0.0, %v480
    %v482 = vpop.f32.mrb[0].mxu0
    %483 = vdwg.mxu0
    %v484 = vlaneseq
    %v485 = vshrl.u32 %v484, 7
    %v486 = vsub.s32 0, %v485
    %v487 = vrot.slane %v481, %v486
    %v488 = vsub.f32 %v295, %v487
    %v489 = vsub.f32 %v300, %v487
    %v490 = vsub.f32 %v305, %v487
    %v491 = vsub.f32 %v310, %v487
    %v492 = vmul.f32 %v488, %v488
    %v493 = vmul.f32 %v489, %v489
    %v494 = vmul.f32 %v490, %v490
    %v495 = vmul.f32 %v491, %v491
    %v496 = vadd.f32 %v492, %v493
    %v497 = vadd.f32 %v496, %v494
    %v498 = vadd.f32 %v497, %v495
    %v499 = vrot.slane %v498, 4
    %v500 = vadd.f32 %v498, %v499
    %v501 = vrot.slane %v500, 2
    %v502 = vadd.f32 %v500, %v501
    %v503 = vrot.slane %v502, 1
    %v504 = vadd.f32 %v502, %v503
    %505 = vmatprep.subr.mxu0 0.0
    %506 = vmatpush1.msra.mxu0 %v322
    %507 = vmatprep.subr.mxu0 0.0
    %508 = vmatpush1.msra.mxu0 %v323
    %509 = vmatprep.subr.mxu0 0.0
    %510 = vmatpush1.msra.mxu0 %v324
    %511 = vmatprep.subr.mxu0 0.0
    %512 = vmatpush1.msra.mxu0 %v325
    %513 = vmatprep.subr.mxu0 0.0
    %514 = vmatpush1.msra.mxu0 %v326
    %515 = vmatprep.subr.mxu0 0.0
    %516 = vmatpush1.msra.mxu0 %v327
    %517 = vmatprep.subr.mxu0 0.0
    %518 = vmatpush1.msra.mxu0 %v328
    %519 = vmatprep.subr.mxu0 0.0
    %520 = vmatpush1.msra.mxu0 %v329
    %521 = vmatprep.subr.mxu0 0.0
    %522 = vmatpush1.msra.mxu0 %v330
    %523 = vmatprep.subr.mxu0 0.0
    %524 = vmatpush1.msra.mxu0 %v331
    %525 = vmatprep.subr.mxu0 0.0
    %526 = vmatpush1.msra.mxu0 %v332
    %527 = vmatprep.subr.mxu0 0.0
    %528 = vmatpush1.msra.mxu0 %v333
    %529 = vmatprep.subr.mxu0 0.0
    %530 = vmatpush1.msra.mxu0 %v334
    %531 = vmatprep.subr.mxu0 0.0
    %532 = vmatpush1.msra.mxu0 %v335
    %533 = vmatprep.subr.mxu0 0.0
    %534 = vmatpush1.msra.mxu0 %v336
    %535 = vmatprep.subr.mxu0 0.0
    %536 = vmatpush1.msra.mxu0 %v337
    %537 = vmatprep.subr.mxu0 0.0
    %538 = vmatpush1.msra.mxu0 0.0
    %539 = vmatprep.subr.mxu0 0.0
    %540 = vmatpush1.msra.mxu0 0.0
    %541 = vmatprep.subr.mxu0 0.0
    %542 = vmatpush1.msra.mxu0 0.0
    %543 = vmatprep.subr.mxu0 0.0
    %544 = vmatpush1.msra.mxu0 0.0
    %545 = vmatprep.subr.mxu0 0.0
    %546 = vmatpush1.msra.mxu0 0.0
    %547 = vmatprep.subr.mxu0 0.0
    %548 = vmatpush1.msra.mxu0 0.0
    %549 = vmatprep.subr.mxu0 0.0
    %550 = vmatpush1.msra.mxu0 0.0
    %551 = vmatprep.subr.mxu0 0.0
    %552 = vmatpush1.msra.mxu0 0.0
    %553 = vmatprep.subr.mxu0 0.0
    %554 = vmatpush1.msra.mxu0 0.0
    %555 = vmatprep.subr.mxu0 0.0
    %556 = vmatpush1.msra.mxu0 0.0
    %557 = vmatprep.subr.mxu0 0.0
    %558 = vmatpush1.msra.mxu0 0.0
    %559 = vmatprep.subr.mxu0 0.0
    %560 = vmatpush1.msra.mxu0 0.0
    %561 = vmatprep.subr.mxu0 0.0
    %562 = vmatpush1.msra.mxu0 0.0
    %563 = vmatprep.subr.mxu0 0.0
    %564 = vmatpush1.msra.mxu0 0.0
    %565 = vmatprep.subr.mxu0 0.0
    %566 = vmatpush1.msra.mxu0 0.0
    %567 = vmatprep.subr.mxu0 0.0
    %568 = vmatpush1.msra.mxu0 0.0
    %569 = vmatprep.mubr.f32.mxu0 0.0
    %570 = vmatmul.mubr.f32.gmra.mrb[0].mxu0 %v504
    %v571 = vpop.f32.mrb[0].mxu0
    %v572 = vadd.f32 0.0, %v571
    %v573 = vpop.f32.mrb[0].mxu0
    %574 = vdwg.mxu0
    %v575 = vmul.f32 %v572, 0.001953125
    %v576 = vld [vmem:[%s2] sm:$0x1]
    %v577 = vadd.f32 %v575, 1e-05
    %v578 = vrsqrt.pop %v577
    %v579 = vmul.f32 %v576, %v578
    %v581 = vsel %vm410, %v579, 0
    %583 = vmatprep.subr.mxu0 0.0
    %584 = vmatpush1.msra.mxu0 %v409
    %585 = vmatprep.subr.mxu0 0.0
    %586 = vmatpush1.msra.mxu0 0.0
    %587 = vmatprep.subr.mxu0 0.0
    %588 = vmatpush1.msra.mxu0 0.0
    %589 = vmatprep.subr.mxu0 0.0
    %590 = vmatpush1.msra.mxu0 0.0
    %591 = vmatprep.subr.mxu0 0.0
    %592 = vmatpush1.msra.mxu0 0.0
    %593 = vmatprep.subr.mxu0 0.0
    %594 = vmatpush1.msra.mxu0 0.0
    %595 = vmatprep.subr.mxu0 0.0
    %596 = vmatpush1.msra.mxu0 0.0
    %597 = vmatprep.subr.mxu0 0.0
    %598 = vmatpush1.msra.mxu0 0.0
    %599 = vmatprep.subr.mxu0 0.0
    %600 = vmatpush1.msra.mxu0 0.0
    %601 = vmatprep.subr.mxu0 0.0
    %602 = vmatpush1.msra.mxu0 0.0
    %603 = vmatprep.subr.mxu0 0.0
    %604 = vmatpush1.msra.mxu0 0.0
    %605 = vmatprep.subr.mxu0 0.0
    %606 = vmatpush1.msra.mxu0 0.0
    %607 = vmatprep.subr.mxu0 0.0
    %608 = vmatpush1.msra.mxu0 0.0
    %609 = vmatprep.subr.mxu0 0.0
    %610 = vmatpush1.msra.mxu0 0.0
    %611 = vmatprep.subr.mxu0 0.0
    %612 = vmatpush1.msra.mxu0 0.0
    %613 = vmatprep.subr.mxu0 0.0
    %614 = vmatpush1.msra.mxu0 0.0
    %615 = vmatprep.subr.mxu0 0.0
    %616 = vmatpush1.msra.mxu0 0.0
    %617 = vmatprep.subr.mxu0 0.0
    %618 = vmatpush1.msra.mxu0 0.0
    %619 = vmatprep.subr.mxu0 0.0
    %620 = vmatpush1.msra.mxu0 0.0
    %621 = vmatprep.subr.mxu0 0.0
    %622 = vmatpush1.msra.mxu0 0.0
    %623 = vmatprep.subr.mxu0 0.0
    %624 = vmatpush1.msra.mxu0 0.0
    %625 = vmatprep.subr.mxu0 0.0
    %626 = vmatpush1.msra.mxu0 0.0
    %627 = vmatprep.subr.mxu0 0.0
    %628 = vmatpush1.msra.mxu0 0.0
    %629 = vmatprep.subr.mxu0 0.0
    %630 = vmatpush1.msra.mxu0 0.0
    %631 = vmatprep.subr.mxu0 0.0
    %632 = vmatpush1.msra.mxu0 0.0
    %633 = vmatprep.subr.mxu0 0.0
    %634 = vmatpush1.msra.mxu0 0.0
    %635 = vmatprep.subr.mxu0 0.0
    %636 = vmatpush1.msra.mxu0 0.0
    %637 = vmatprep.subr.mxu0 0.0
    %638 = vmatpush1.msra.mxu0 0.0
    %639 = vmatprep.subr.mxu0 0.0
    %640 = vmatpush1.msra.mxu0 0.0
    %641 = vmatprep.subr.mxu0 0.0
    %642 = vmatpush1.msra.mxu0 0.0
    %643 = vmatprep.subr.mxu0 0.0
    %644 = vmatpush1.msra.mxu0 0.0
    %645 = vmatprep.subr.mxu0 0.0
    %646 = vmatpush1.msra.mxu0 0.0
    %647 = vmatprep.mubr.f32.mxu0 0.0
    %648 = vmatmul.mubr.f32.gmra.mrb[0].mxu0 %v581
    %v649 = vpop.f32.mrb[0].mxu0
    %v650 = vadd.f32 0.0, %v649
    %v651 = vpop.f32.mrb[0].mxu0
    %652 = vdwg.mxu0
    %v653 = vld [vmem:[%s3] sm:$0x1]
    %v655 = vsel %vm410, %v653, 0
    %657 = vmatprep.subr.mxu0 0.0
    %658 = vmatpush1.msra.mxu0 %v409
    %659 = vmatprep.subr.mxu0 0.0
    %660 = vmatpush1.msra.mxu0 0.0
    %661 = vmatprep.subr.mxu0 0.0
    %662 = vmatpush1.msra.mxu0 0.0
    %663 = vmatprep.subr.mxu0 0.0
    %664 = vmatpush1.msra.mxu0 0.0
    %665 = vmatprep.subr.mxu0 0.0
    %666 = vmatpush1.msra.mxu0 0.0
    %667 = vmatprep.subr.mxu0 0.0
    %668 = vmatpush1.msra.mxu0 0.0
    %669 = vmatprep.subr.mxu0 0.0
    %670 = vmatpush1.msra.mxu0 0.0
    %671 = vmatprep.subr.mxu0 0.0
    %672 = vmatpush1.msra.mxu0 0.0
    %673 = vmatprep.subr.mxu0 0.0
    %674 = vmatpush1.msra.mxu0 0.0
    %675 = vmatprep.subr.mxu0 0.0
    %676 = vmatpush1.msra.mxu0 0.0
    %677 = vmatprep.subr.mxu0 0.0
    %678 = vmatpush1.msra.mxu0 0.0
    %679 = vmatprep.subr.mxu0 0.0
    %680 = vmatpush1.msra.mxu0 0.0
    %681 = vmatprep.subr.mxu0 0.0
    %682 = vmatpush1.msra.mxu0 0.0
    %683 = vmatprep.subr.mxu0 0.0
    %684 = vmatpush1.msra.mxu0 0.0
    %685 = vmatprep.subr.mxu0 0.0
    %686 = vmatpush1.msra.mxu0 0.0
    %687 = vmatprep.subr.mxu0 0.0
    %688 = vmatpush1.msra.mxu0 0.0
    %689 = vmatprep.subr.mxu0 0.0
    %690 = vmatpush1.msra.mxu0 0.0
    %691 = vmatprep.subr.mxu0 0.0
    %692 = vmatpush1.msra.mxu0 0.0
    %693 = vmatprep.subr.mxu0 0.0
    %694 = vmatpush1.msra.mxu0 0.0
    %695 = vmatprep.subr.mxu0 0.0
    %696 = vmatpush1.msra.mxu0 0.0
    %697 = vmatprep.subr.mxu0 0.0
    %698 = vmatpush1.msra.mxu0 0.0
    %699 = vmatprep.subr.mxu0 0.0
    %700 = vmatpush1.msra.mxu0 0.0
    %701 = vmatprep.subr.mxu0 0.0
    %702 = vmatpush1.msra.mxu0 0.0
    %703 = vmatprep.subr.mxu0 0.0
    %704 = vmatpush1.msra.mxu0 0.0
    %705 = vmatprep.subr.mxu0 0.0
    %706 = vmatpush1.msra.mxu0 0.0
    %707 = vmatprep.subr.mxu0 0.0
    %708 = vmatpush1.msra.mxu0 0.0
    %709 = vmatprep.subr.mxu0 0.0
    %710 = vmatpush1.msra.mxu0 0.0
    %711 = vmatprep.subr.mxu0 0.0
    %712 = vmatpush1.msra.mxu0 0.0
    %713 = vmatprep.subr.mxu0 0.0
    %714 = vmatpush1.msra.mxu0 0.0
    %715 = vmatprep.subr.mxu0 0.0
    %716 = vmatpush1.msra.mxu0 0.0
    %717 = vmatprep.subr.mxu0 0.0
    %718 = vmatpush1.msra.mxu0 0.0
    %719 = vmatprep.subr.mxu0 0.0
    %720 = vmatpush1.msra.mxu0 0.0
    %721 = vmatprep.mubr.f32.mxu0 0.0
    %722 = vmatmul.mubr.f32.gmra.mrb[0].mxu0 %v655
    %v723 = vpop.f32.mrb[0].mxu0
    %v724 = vadd.f32 0.0, %v723
    %v725 = vpop.f32.mrb[0].mxu0
    %726 = vdwg.mxu0
    %v727 = vlaneseq
    %v728 = vshrl.u32 %v727, 7
    %v729 = vsub.s32 0, %v728
    %v730 = vrot.slane %v650, %v729
    %v731 = vmul.f32 %v488, %v730
    %v732 = vmul.f32 %v489, %v730
    %v733 = vmul.f32 %v490, %v730
    %v734 = vmul.f32 %v491, %v730
    %v735 = vlaneseq
    %v736 = vshrl.u32 %v735, 7
    %v737 = vsub.s32 0, %v736
    %v738 = vrot.slane %v724, %v737
    %v739 = vadd.f32 %v731, %v738
    %v740 = vadd.f32 %v732, %v738
    %v741 = vadd.f32 %v733, %v738
    %v742 = vadd.f32 %v734, %v738
    %vm743 = vcmp.gt.f32.partialorder %v739, 0.0
    %vm744 = vcmp.gt.f32.partialorder %v740, 0.0
    %vm745 = vcmp.gt.f32.partialorder %v741, 0.0
    %vm746 = vcmp.gt.f32.partialorder %v742, 0.0
    %v747 = vmul.f32 %v739, 0.01
    %v748 = vmul.f32 %v740, 0.01
    %v749 = vmul.f32 %v741, 0.01
    %v750 = vmul.f32 %v742, 0.01
    %v751 = vsel %vm743, %v739, %v747
    %v752 = vsel %vm744, %v740, %v748
    %v753 = vsel %vm745, %v741, %v749
    %v754 = vsel %vm746, %v742, %v750
    %v759 = vrot.slane %v751, 7
    %v760 = vrot.slane %v752, 7
    %v761 = vsel %vm69, %v759, %v760
    %v762 = vrot.slane %v753, 7
    %v763 = vrot.slane %v754, 7
    %v764 = vsel %vm69, %v762, %v763
    %v769 = vsel %vm69, 0.0, %v759
    %v770 = vsel %vm69, 0.0, %v762
    %v771 = vrot.slane %v751, 1
    %v772 = vrot.slane %v752, 1
    %v773 = vsel %vm82, %v771, %v772
    %v774 = vrot.slane %v753, 1
    %v775 = vrot.slane %v754, 1
    %v776 = vsel %vm82, %v774, %v775
    %v781 = vsel %vm82, %v772, 0.0
    %v782 = vsel %vm82, %v775, 0.0
    %v783 = vld [vmem:[#allocation5] sm:$0xff]
    %v784 = vld [vmem:[#allocation5 + $0x8] sm:$0xff]
    %v785 = vld [vmem:[#allocation5 + $0x10] sm:$0xff]
    %v786 = vld [vmem:[#allocation5 + $0x18] sm:$0xff]
    %v787 = vld [vmem:[#allocation5 + $0x20] sm:$0xff]
    %v788 = vld [vmem:[#allocation5 + $0x28] sm:$0xff]
    %v789 = vld [vmem:[#allocation5 + $0x30] sm:$0xff]
    %v790 = vld [vmem:[#allocation5 + $0x38] sm:$0xff]
    %v791 = vld [vmem:[#allocation5 + $0x40] sm:$0xff]
    %v792 = vld [vmem:[#allocation5 + $0x48] sm:$0xff]
    %v793 = vld [vmem:[#allocation5 + $0x50] sm:$0xff]
    %v794 = vld [vmem:[#allocation5 + $0x58] sm:$0xff]
    %v795 = vld [vmem:[#allocation5 + $0x60] sm:$0xff]
    %v796 = vld [vmem:[#allocation5 + $0x68] sm:$0xff]
    %v797 = vld [vmem:[#allocation5 + $0x70] sm:$0xff]
    %v798 = vld [vmem:[#allocation5 + $0x78] sm:$0xff]
    %v799 = vld [vmem:[#allocation5 + $0x80] sm:$0xff]
    %v800 = vld [vmem:[#allocation5 + $0x88] sm:$0xff]
    %v801 = vld [vmem:[#allocation5 + $0x90] sm:$0xff]
    %v802 = vld [vmem:[#allocation5 + $0x98] sm:$0xff]
    %v803 = vld [vmem:[#allocation5 + $0xa0] sm:$0xff]
    %v804 = vld [vmem:[#allocation5 + $0xa8] sm:$0xff]
    %v805 = vld [vmem:[#allocation5 + $0xb0] sm:$0xff]
    %v806 = vld [vmem:[#allocation5 + $0xb8] sm:$0xff]
    %v807 = vld [vmem:[#allocation5 + $0xc0] sm:$0xff]
    %v808 = vld [vmem:[#allocation5 + $0xc8] sm:$0xff]
    %v809 = vld [vmem:[#allocation5 + $0xd0] sm:$0xff]
    %v810 = vld [vmem:[#allocation5 + $0xd8] sm:$0xff]
    %v811 = vld [vmem:[#allocation5 + $0xe0] sm:$0xff]
    %v812 = vld [vmem:[#allocation5 + $0xe8] sm:$0xff]
    %v813 = vld [vmem:[#allocation5 + $0xf0] sm:$0xff]
    %v814 = vld [vmem:[#allocation5 + $0xf8] sm:$0xff]
    %v815 = vld [vmem:[#allocation5 + $0x100] sm:$0xff]
    %v816 = vld [vmem:[#allocation5 + $0x108] sm:$0xff]
    %v817 = vld [vmem:[#allocation5 + $0x110] sm:$0xff]
    %v818 = vld [vmem:[#allocation5 + $0x118] sm:$0xff]
    %v819 = vld [vmem:[#allocation5 + $0x120] sm:$0xff]
    %v820 = vld [vmem:[#allocation5 + $0x128] sm:$0xff]
    %v821 = vld [vmem:[#allocation5 + $0x130] sm:$0xff]
    %v822 = vld [vmem:[#allocation5 + $0x138] sm:$0xff]
    %v823 = vld [vmem:[#allocation5 + $0x140] sm:$0xff]
    %v824 = vld [vmem:[#allocation5 + $0x148] sm:$0xff]
    %v825 = vld [vmem:[#allocation5 + $0x150] sm:$0xff]
    %v826 = vld [vmem:[#allocation5 + $0x158] sm:$0xff]
    %v827 = vld [vmem:[#allocation5 + $0x160] sm:$0xff]
    %v828 = vld [vmem:[#allocation5 + $0x168] sm:$0xff]
    %v829 = vld [vmem:[#allocation5 + $0x170] sm:$0xff]
    %v830 = vld [vmem:[#allocation5 + $0x178] sm:$0xff]
    %831 = vmatprep.subr.mxu0 0.0
    %832 = vmatpush1.msra.mxu0 %v783
    %833 = vmatprep.subr.mxu0 0.0
    %834 = vmatpush1.msra.mxu0 %v784
    %835 = vmatprep.subr.mxu0 0.0
    %836 = vmatpush1.msra.mxu0 %v785
    %837 = vmatprep.subr.mxu0 0.0
    %838 = vmatpush1.msra.mxu0 %v786
    %839 = vmatprep.subr.mxu0 0.0
    %840 = vmatpush1.msra.mxu0 %v787
    %841 = vmatprep.subr.mxu0 0.0
    %842 = vmatpush1.msra.mxu0 %v788
    %843 = vmatprep.subr.mxu0 0.0
    %844 = vmatpush1.msra.mxu0 %v789
    %845 = vmatprep.subr.mxu0 0.0
    %846 = vmatpush1.msra.mxu0 %v790
    %847 = vmatprep.subr.mxu0 0.0
    %848 = vmatpush1.msra.mxu0 %v791
    %849 = vmatprep.subr.mxu0 0.0
    %850 = vmatpush1.msra.mxu0 %v792
    %851 = vmatprep.subr.mxu0 0.0
    %852 = vmatpush1.msra.mxu0 %v793
    %853 = vmatprep.subr.mxu0 0.0
    %854 = vmatpush1.msra.mxu0 %v794
    %855 = vmatprep.subr.mxu0 0.0
    %856 = vmatpush1.msra.mxu0 %v795
    %857 = vmatprep.subr.mxu0 0.0
    %858 = vmatpush1.msra.mxu0 %v796
    %859 = vmatprep.subr.mxu0 0.0
    %860 = vmatpush1.msra.mxu0 %v797
    %861 = vmatprep.subr.mxu0 0.0
    %862 = vmatpush1.msra.mxu0 %v798
    %863 = vmatprep.subr.mxu0 0.0
    %864 = vmatpush1.msra.mxu0 %v799
    %865 = vmatprep.subr.mxu0 0.0
    %866 = vmatpush1.msra.mxu0 %v800
    %867 = vmatprep.subr.mxu0 0.0
    %868 = vmatpush1.msra.mxu0 %v801
    %869 = vmatprep.subr.mxu0 0.0
    %870 = vmatpush1.msra.mxu0 %v802
    %871 = vmatprep.subr.mxu0 0.0
    %872 = vmatpush1.msra.mxu0 %v803
    %873 = vmatprep.subr.mxu0 0.0
    %874 = vmatpush1.msra.mxu0 %v804
    %875 = vmatprep.subr.mxu0 0.0
    %876 = vmatpush1.msra.mxu0 %v805
    %877 = vmatprep.subr.mxu0 0.0
    %878 = vmatpush1.msra.mxu0 %v806
    %879 = vmatprep.subr.mxu0 0.0
    %880 = vmatpush1.msra.mxu0 %v807
    %881 = vmatprep.subr.mxu0 0.0
    %882 = vmatpush1.msra.mxu0 %v808
    %883 = vmatprep.subr.mxu0 0.0
    %884 = vmatpush1.msra.mxu0 %v809
    %885 = vmatprep.subr.mxu0 0.0
    %886 = vmatpush1.msra.mxu0 %v810
    %887 = vmatprep.subr.mxu0 0.0
    %888 = vmatpush1.msra.mxu0 %v811
    %889 = vmatprep.subr.mxu0 0.0
    %890 = vmatpush1.msra.mxu0 %v812
    %891 = vmatprep.subr.mxu0 0.0
    %892 = vmatpush1.msra.mxu0 %v813
    %893 = vmatprep.subr.mxu0 0.0
    %894 = vmatpush1.msra.mxu0 %v814
    %895 = vmatprep.mubr.f32.mxu0 %v751
    %896 = vmatmul.mubr.f32.gmra.mrb[0].mxu0 %v769
    %v897 = vpop.f32.mrb[0].mxu0
    %v898 = vadd.f32 0.0, %v897
    %v899 = vpop.f32.mrb[0].mxu0
    %900 = vmatprep.mubr.f32.mxu0 %v752
    %901 = vmatmul.mubr.f32.gmra.mrb[0].mxu0 %v761
    %v902 = vpop.f32.mrb[0].mxu0
    %v903 = vadd.f32 0.0, %v902
    %v904 = vpop.f32.mrb[0].mxu0
    %905 = vmatprep.mubr.f32.mxu0 %v753
    %906 = vmatmul.mubr.f32.gmra.mrb[0].mxu0 %v770
    %v907 = vpop.f32.mrb[0].mxu0
    %v908 = vadd.f32 0.0, %v907
    %v909 = vpop.f32.mrb[0].mxu0
    %910 = vmatprep.mubr.f32.mxu0 %v754
    %911 = vmatmul.mubr.f32.gmra.mrb[0].mxu0 %v764
    %v912 = vpop.f32.mrb[0].mxu0
    %v913 = vadd.f32 0.0, %v912
    %v914 = vpop.f32.mrb[0].mxu0
    %915 = vdwg.mxu0
    %916 = vmatprep.subr.mxu0 0.0
    %917 = vmatpush1.msra.mxu0 %v815
    %918 = vmatprep.subr.mxu0 0.0
    %919 = vmatpush1.msra.mxu0 %v816
    %920 = vmatprep.subr.mxu0 0.0
    %921 = vmatpush1.msra.mxu0 %v817
    %922 = vmatprep.subr.mxu0 0.0
    %923 = vmatpush1.msra.mxu0 %v818
    %924 = vmatprep.subr.mxu0 0.0
    %925 = vmatpush1.msra.mxu0 %v819
    %926 = vmatprep.subr.mxu0 0.0
    %927 = vmatpush1.msra.mxu0 %v820
    %928 = vmatprep.subr.mxu0 0.0
    %929 = vmatpush1.msra.mxu0 %v821
    %930 = vmatprep.subr.mxu0 0.0
    %931 = vmatpush1.msra.mxu0 %v822
    %932 = vmatprep.subr.mxu0 0.0
    %933 = vmatpush1.msra.mxu0 %v823
    %934 = vmatprep.subr.mxu0 0.0
    %935 = vmatpush1.msra.mxu0 %v824
    %936 = vmatprep.subr.mxu0 0.0
    %937 = vmatpush1.msra.mxu0 %v825
    %938 = vmatprep.subr.mxu0 0.0
    %939 = vmatpush1.msra.mxu0 %v826
    %940 = vmatprep.subr.mxu0 0.0
    %941 = vmatpush1.msra.mxu0 %v827
    %942 = vmatprep.subr.mxu0 0.0
    %943 = vmatpush1.msra.mxu0 %v828
    %944 = vmatprep.subr.mxu0 0.0
    %945 = vmatpush1.msra.mxu0 %v829
    %946 = vmatprep.subr.mxu0 0.0
    %947 = vmatpush1.msra.mxu0 %v830
    %948 = vmatprep.subr.mxu0 0.0
    %949 = vmatpush1.msra.mxu0 0.0
    %950 = vmatprep.subr.mxu0 0.0
    %951 = vmatpush1.msra.mxu0 0.0
    %952 = vmatprep.subr.mxu0 0.0
    %953 = vmatpush1.msra.mxu0 0.0
    %954 = vmatprep.subr.mxu0 0.0
    %955 = vmatpush1.msra.mxu0 0.0
    %956 = vmatprep.subr.mxu0 0.0
    %957 = vmatpush1.msra.mxu0 0.0
    %958 = vmatprep.subr.mxu0 0.0
    %959 = vmatpush1.msra.mxu0 0.0
    %960 = vmatprep.subr.mxu0 0.0
    %961 = vmatpush1.msra.mxu0 0.0
    %962 = vmatprep.subr.mxu0 0.0
    %963 = vmatpush1.msra.mxu0 0.0
    %964 = vmatprep.subr.mxu0 0.0
    %965 = vmatpush1.msra.mxu0 0.0
    %966 = vmatprep.subr.mxu0 0.0
    %967 = vmatpush1.msra.mxu0 0.0
    %968 = vmatprep.subr.mxu0 0.0
    %969 = vmatpush1.msra.mxu0 0.0
    %970 = vmatprep.subr.mxu0 0.0
    %971 = vmatpush1.msra.mxu0 0.0
    %972 = vmatprep.subr.mxu0 0.0
    %973 = vmatpush1.msra.mxu0 0.0
    %974 = vmatprep.subr.mxu0 0.0
    %975 = vmatpush1.msra.mxu0 0.0
    %976 = vmatprep.subr.mxu0 0.0
    %977 = vmatpush1.msra.mxu0 0.0
    %978 = vmatprep.subr.mxu0 0.0
    %979 = vmatpush1.msra.mxu0 0.0
    %980 = vmatprep.mubr.f32.mxu0 0.0
    %981 = vmatmul.mubr.f32.gmra.mrb[0].mxu0 %v773
    %v982 = vpop.f32.mrb[0].mxu0
    %v983 = vadd.f32 %v898, %v982
    %v984 = vpop.f32.mrb[0].mxu0
    %985 = vmatprep.mubr.f32.mxu0 0.0
    %986 = vmatmul.mubr.f32.gmra.mrb[0].mxu0 %v781
    %v987 = vpop.f32.mrb[0].mxu0
    %v988 = vadd.f32 %v903, %v987
    %v989 = vpop.f32.mrb[0].mxu0
    %990 = vmatprep.mubr.f32.mxu0 0.0
    %991 = vmatmul.mubr.f32.gmra.mrb[0].mxu0 %v776
    %v992 = vpop.f32.mrb[0].mxu0
    %v993 = vadd.f32 %v908, %v992
    %v994 = vpop.f32.mrb[0].mxu0
    %995 = vmatprep.mubr.f32.mxu0 0.0
    %996 = vmatmul.mubr.f32.gmra.mrb[0].mxu0 %v782
    %v997 = vpop.f32.mrb[0].mxu0
    %v998 = vadd.f32 %v913, %v997
    %v999 = vpop.f32.mrb[0].mxu0
    %1000 = vdwg.mxu0
    %v1001 = vadd.f32 %v983, %v988
    %v1002 = vadd.f32 %v1001, %v993
    %v1003 = vadd.f32 %v1002, %v998
    %v1004 = vrot.slane %v1003, 4
    %v1005 = vadd.f32 %v1003, %v1004
    %v1006 = vrot.slane %v1005, 2
    %v1007 = vadd.f32 %v1005, %v1006
    %v1008 = vrot.slane %v1007, 1
    %v1009 = vadd.f32 %v1007, %v1008
    %1010 = vmatprep.subr.mxu0 0.0
    %1011 = vmatpush1.msra.mxu0 %v322
    %1012 = vmatprep.subr.mxu0 0.0
    %1013 = vmatpush1.msra.mxu0 %v323
    %1014 = vmatprep.subr.mxu0 0.0
    %1015 = vmatpush1.msra.mxu0 %v324
    %1016 = vmatprep.subr.mxu0 0.0
    %1017 = vmatpush1.msra.mxu0 %v325
    %1018 = vmatprep.subr.mxu0 0.0
    %1019 = vmatpush1.msra.mxu0 %v326
    %1020 = vmatprep.subr.mxu0 0.0
    %1021 = vmatpush1.msra.mxu0 %v327
    %1022 = vmatprep.subr.mxu0 0.0
    %1023 = vmatpush1.msra.mxu0 %v328
    %1024 = vmatprep.subr.mxu0 0.0
    %1025 = vmatpush1.msra.mxu0 %v329
    %1026 = vmatprep.subr.mxu0 0.0
    %1027 = vmatpush1.msra.mxu0 %v330
    %1028 = vmatprep.subr.mxu0 0.0
    %1029 = vmatpush1.msra.mxu0 %v331
    %1030 = vmatprep.subr.mxu0 0.0
    %1031 = vmatpush1.msra.mxu0 %v332
    %1032 = vmatprep.subr.mxu0 0.0
    %1033 = vmatpush1.msra.mxu0 %v333
    %1034 = vmatprep.subr.mxu0 0.0
    %1035 = vmatpush1.msra.mxu0 %v334
    %1036 = vmatprep.subr.mxu0 0.0
    %1037 = vmatpush1.msra.mxu0 %v335
    %1038 = vmatprep.subr.mxu0 0.0
    %1039 = vmatpush1.msra.mxu0 %v336
    %1040 = vmatprep.subr.mxu0 0.0
    %1041 = vmatpush1.msra.mxu0 %v337
    %1042 = vmatprep.subr.mxu0 0.0
    %1043 = vmatpush1.msra.mxu0 0.0
    %1044 = vmatprep.subr.mxu0 0.0
    %1045 = vmatpush1.msra.mxu0 0.0
    %1046 = vmatprep.subr.mxu0 0.0
    %1047 = vmatpush1.msra.mxu0 0.0
    %1048 = vmatprep.subr.mxu0 0.0
    %1049 = vmatpush1.msra.mxu0 0.0
    %1050 = vmatprep.subr.mxu0 0.0
    %1051 = vmatpush1.msra.mxu0 0.0
    %1052 = vmatprep.subr.mxu0 0.0
    %1053 = vmatpush1.msra.mxu0 0.0
    %1054 = vmatprep.subr.mxu0 0.0
    %1055 = vmatpush1.msra.mxu0 0.0
    %1056 = vmatprep.subr.mxu0 0.0
    %1057 = vmatpush1.msra.mxu0 0.0
    %1058 = vmatprep.subr.mxu0 0.0
    %1059 = vmatpush1.msra.mxu0 0.0
    %1060 = vmatprep.subr.mxu0 0.0
    %1061 = vmatpush1.msra.mxu0 0.0
    %1062 = vmatprep.subr.mxu0 0.0
    %1063 = vmatpush1.msra.mxu0 0.0
    %1064 = vmatprep.subr.mxu0 0.0
    %1065 = vmatpush1.msra.mxu0 0.0
    %1066 = vmatprep.subr.mxu0 0.0
    %1067 = vmatpush1.msra.mxu0 0.0
    %1068 = vmatprep.subr.mxu0 0.0
    %1069 = vmatpush1.msra.mxu0 0.0
    %1070 = vmatprep.subr.mxu0 0.0
    %1071 = vmatpush1.msra.mxu0 0.0
    %1072 = vmatprep.subr.mxu0 0.0
    %1073 = vmatpush1.msra.mxu0 0.0
    %1074 = vmatprep.mubr.f32.mxu0 0.0
    %1075 = vmatmul.mubr.f32.gmra.mrb[0].mxu0 %v1009
    %v1076 = vpop.f32.mrb[0].mxu0
    %v1077 = vadd.f32 0.0, %v1076
    %v1078 = vpop.f32.mrb[0].mxu0
    %1079 = vdwg.mxu0
    %v1080 = vmul.f32 %v1077, 0.001953125
    %v1082 = vsel %vm410, %v1080, 0
    %1084 = vmatprep.subr.mxu0 0.0
    %1085 = vmatpush1.msra.mxu0 %v409
    %1086 = vmatprep.subr.mxu0 0.0
    %1087 = vmatpush1.msra.mxu0 0.0
    %1088 = vmatprep.subr.mxu0 0.0
    %1089 = vmatpush1.msra.mxu0 0.0
    %1090 = vmatprep.subr.mxu0 0.0
    %1091 = vmatpush1.msra.mxu0 0.0
    %1092 = vmatprep.subr.mxu0 0.0
    %1093 = vmatpush1.msra.mxu0 0.0
    %1094 = vmatprep.subr.mxu0 0.0
    %1095 = vmatpush1.msra.mxu0 0.0
    %1096 = vmatprep.subr.mxu0 0.0
    %1097 = vmatpush1.msra.mxu0 0.0
    %1098 = vmatprep.subr.mxu0 0.0
    %1099 = vmatpush1.msra.mxu0 0.0
    %1100 = vmatprep.subr.mxu0 0.0
    %1101 = vmatpush1.msra.mxu0 0.0
    %1102 = vmatprep.subr.mxu0 0.0
    %1103 = vmatpush1.msra.mxu0 0.0
    %1104 = vmatprep.subr.mxu0 0.0
    %1105 = vmatpush1.msra.mxu0 0.0
    %1106 = vmatprep.subr.mxu0 0.0
    %1107 = vmatpush1.msra.mxu0 0.0
    %1108 = vmatprep.subr.mxu0 0.0
    %1109 = vmatpush1.msra.mxu0 0.0
    %1110 = vmatprep.subr.mxu0 0.0
    %1111 = vmatpush1.msra.mxu0 0.0
    %1112 = vmatprep.subr.mxu0 0.0
    %1113 = vmatpush1.msra.mxu0 0.0
    %1114 = vmatprep.subr.mxu0 0.0
    %1115 = vmatpush1.msra.mxu0 0.0
    %1116 = vmatprep.subr.mxu0 0.0
    %1117 = vmatpush1.msra.mxu0 0.0
    %1118 = vmatprep.subr.mxu0 0.0
    %1119 = vmatpush1.msra.mxu0 0.0
    %1120 = vmatprep.subr.mxu0 0.0
    %1121 = vmatpush1.msra.mxu0 0.0
    %1122 = vmatprep.subr.mxu0 0.0
    %1123 = vmatpush1.msra.mxu0 0.0
    %1124 = vmatprep.subr.mxu0 0.0
    %1125 = vmatpush1.msra.mxu0 0.0
    %1126 = vmatprep.subr.mxu0 0.0
    %1127 = vmatpush1.msra.mxu0 0.0
    %1128 = vmatprep.subr.mxu0 0.0
    %1129 = vmatpush1.msra.mxu0 0.0
    %1130 = vmatprep.subr.mxu0 0.0
    %1131 = vmatpush1.msra.mxu0 0.0
    %1132 = vmatprep.subr.mxu0 0.0
    %1133 = vmatpush1.msra.mxu0 0.0
    %1134 = vmatprep.subr.mxu0 0.0
    %1135 = vmatpush1.msra.mxu0 0.0
    %1136 = vmatprep.subr.mxu0 0.0
    %1137 = vmatpush1.msra.mxu0 0.0
    %1138 = vmatprep.subr.mxu0 0.0
    %1139 = vmatpush1.msra.mxu0 0.0
    %1140 = vmatprep.subr.mxu0 0.0
    %1141 = vmatpush1.msra.mxu0 0.0
    %1142 = vmatprep.subr.mxu0 0.0
    %1143 = vmatpush1.msra.mxu0 0.0
    %1144 = vmatprep.subr.mxu0 0.0
    %1145 = vmatpush1.msra.mxu0 0.0
    %1146 = vmatprep.subr.mxu0 0.0
    %1147 = vmatpush1.msra.mxu0 0.0
    %1148 = vmatprep.mubr.f32.mxu0 0.0
    %1149 = vmatmul.mubr.f32.gmra.mrb[0].mxu0 %v1082
    %v1150 = vpop.f32.mrb[0].mxu0
    %v1151 = vadd.f32 0.0, %v1150
    %v1152 = vpop.f32.mrb[0].mxu0
    %1153 = vdwg.mxu0
    %v1154 = vlaneseq
    %v1155 = vshrl.u32 %v1154, 7
    %v1156 = vsub.s32 0, %v1155
    %v1157 = vrot.slane %v1151, %v1156
    %v1158 = vsub.f32 %v983, %v1157
    %v1159 = vsub.f32 %v988, %v1157
    %v1160 = vsub.f32 %v993, %v1157
    %v1161 = vsub.f32 %v998, %v1157
    %v1162 = vmul.f32 %v1158, %v1158
    %v1163 = vmul.f32 %v1159, %v1159
    %v1164 = vmul.f32 %v1160, %v1160
    %v1165 = vmul.f32 %v1161, %v1161
    %v1166 = vadd.f32 %v1162, %v1163
    %v1167 = vadd.f32 %v1166, %v1164
    %v1168 = vadd.f32 %v1167, %v1165
    %v1169 = vrot.slane %v1168, 4
    %v1170 = vadd.f32 %v1168, %v1169
    %v1171 = vrot.slane %v1170, 2
    %v1172 = vadd.f32 %v1170, %v1171
    %v1173 = vrot.slane %v1172, 1
    %v1174 = vadd.f32 %v1172, %v1173
    %1175 = vmatprep.subr.mxu0 0.0
    %1176 = vmatpush1.msra.mxu0 %v322
    %1177 = vmatprep.subr.mxu0 0.0
    %1178 = vmatpush1.msra.mxu0 %v323
    %1179 = vmatprep.subr.mxu0 0.0
    %1180 = vmatpush1.msra.mxu0 %v324
    %1181 = vmatprep.subr.mxu0 0.0
    %1182 = vmatpush1.msra.mxu0 %v325
    %1183 = vmatprep.subr.mxu0 0.0
    %1184 = vmatpush1.msra.mxu0 %v326
    %1185 = vmatprep.subr.mxu0 0.0
    %1186 = vmatpush1.msra.mxu0 %v327
    %1187 = vmatprep.subr.mxu0 0.0
    %1188 = vmatpush1.msra.mxu0 %v328
    %1189 = vmatprep.subr.mxu0 0.0
    %1190 = vmatpush1.msra.mxu0 %v329
    %1191 = vmatprep.subr.mxu0 0.0
    %1192 = vmatpush1.msra.mxu0 %v330
    %1193 = vmatprep.subr.mxu0 0.0
    %1194 = vmatpush1.msra.mxu0 %v331
    %1195 = vmatprep.subr.mxu0 0.0
    %1196 = vmatpush1.msra.mxu0 %v332
    %1197 = vmatprep.subr.mxu0 0.0
    %1198 = vmatpush1.msra.mxu0 %v333
    %1199 = vmatprep.subr.mxu0 0.0
    %1200 = vmatpush1.msra.mxu0 %v334
    %1201 = vmatprep.subr.mxu0 0.0
    %1202 = vmatpush1.msra.mxu0 %v335
    %1203 = vmatprep.subr.mxu0 0.0
    %1204 = vmatpush1.msra.mxu0 %v336
    %1205 = vmatprep.subr.mxu0 0.0
    %1206 = vmatpush1.msra.mxu0 %v337
    %1207 = vmatprep.subr.mxu0 0.0
    %1208 = vmatpush1.msra.mxu0 0.0
    %1209 = vmatprep.subr.mxu0 0.0
    %1210 = vmatpush1.msra.mxu0 0.0
    %1211 = vmatprep.subr.mxu0 0.0
    %1212 = vmatpush1.msra.mxu0 0.0
    %1213 = vmatprep.subr.mxu0 0.0
    %1214 = vmatpush1.msra.mxu0 0.0
    %1215 = vmatprep.subr.mxu0 0.0
    %1216 = vmatpush1.msra.mxu0 0.0
    %1217 = vmatprep.subr.mxu0 0.0
    %1218 = vmatpush1.msra.mxu0 0.0
    %1219 = vmatprep.subr.mxu0 0.0
    %1220 = vmatpush1.msra.mxu0 0.0
    %1221 = vmatprep.subr.mxu0 0.0
    %1222 = vmatpush1.msra.mxu0 0.0
    %1223 = vmatprep.subr.mxu0 0.0
    %1224 = vmatpush1.msra.mxu0 0.0
    %1225 = vmatprep.subr.mxu0 0.0
    %1226 = vmatpush1.msra.mxu0 0.0
    %1227 = vmatprep.subr.mxu0 0.0
    %1228 = vmatpush1.msra.mxu0 0.0
    %1229 = vmatprep.subr.mxu0 0.0
    %1230 = vmatpush1.msra.mxu0 0.0
    %1231 = vmatprep.subr.mxu0 0.0
    %1232 = vmatpush1.msra.mxu0 0.0
    %1233 = vmatprep.subr.mxu0 0.0
    %1234 = vmatpush1.msra.mxu0 0.0
    %1235 = vmatprep.subr.mxu0 0.0
    %1236 = vmatpush1.msra.mxu0 0.0
    %1237 = vmatprep.subr.mxu0 0.0
    %1238 = vmatpush1.msra.mxu0 0.0
    %1239 = vmatprep.mubr.f32.mxu0 0.0
    %1240 = vmatmul.mubr.f32.gmra.mrb[0].mxu0 %v1174
    %v1241 = vpop.f32.mrb[0].mxu0
    %v1242 = vadd.f32 0.0, %v1241
    %v1243 = vpop.f32.mrb[0].mxu0
    %1244 = vdwg.mxu0
    %v1245 = vmul.f32 %v1242, 0.001953125
    %v1246 = vld [vmem:[%s5] sm:$0x1]
    %v1247 = vadd.f32 %v1245, 1e-05
    %v1248 = vrsqrt.pop %v1247
    %v1249 = vmul.f32 %v1246, %v1248
    %v1251 = vsel %vm410, %v1249, 0
    %1253 = vmatprep.subr.mxu0 0.0
    %1254 = vmatpush1.msra.mxu0 %v409
    %1255 = vmatprep.subr.mxu0 0.0
    %1256 = vmatpush1.msra.mxu0 0.0
    %1257 = vmatprep.subr.mxu0 0.0
    %1258 = vmatpush1.msra.mxu0 0.0
    %1259 = vmatprep.subr.mxu0 0.0
    %1260 = vmatpush1.msra.mxu0 0.0
    %1261 = vmatprep.subr.mxu0 0.0
    %1262 = vmatpush1.msra.mxu0 0.0
    %1263 = vmatprep.subr.mxu0 0.0
    %1264 = vmatpush1.msra.mxu0 0.0
    %1265 = vmatprep.subr.mxu0 0.0
    %1266 = vmatpush1.msra.mxu0 0.0
    %1267 = vmatprep.subr.mxu0 0.0
    %1268 = vmatpush1.msra.mxu0 0.0
    %1269 = vmatprep.subr.mxu0 0.0
    %1270 = vmatpush1.msra.mxu0 0.0
    %1271 = vmatprep.subr.mxu0 0.0
    %1272 = vmatpush1.msra.mxu0 0.0
    %1273 = vmatprep.subr.mxu0 0.0
    %1274 = vmatpush1.msra.mxu0 0.0
    %1275 = vmatprep.subr.mxu0 0.0
    %1276 = vmatpush1.msra.mxu0 0.0
    %1277 = vmatprep.subr.mxu0 0.0
    %1278 = vmatpush1.msra.mxu0 0.0
    %1279 = vmatprep.subr.mxu0 0.0
    %1280 = vmatpush1.msra.mxu0 0.0
    %1281 = vmatprep.subr.mxu0 0.0
    %1282 = vmatpush1.msra.mxu0 0.0
    %1283 = vmatprep.subr.mxu0 0.0
    %1284 = vmatpush1.msra.mxu0 0.0
    %1285 = vmatprep.subr.mxu0 0.0
    %1286 = vmatpush1.msra.mxu0 0.0
    %1287 = vmatprep.subr.mxu0 0.0
    %1288 = vmatpush1.msra.mxu0 0.0
    %1289 = vmatprep.subr.mxu0 0.0
    %1290 = vmatpush1.msra.mxu0 0.0
    %1291 = vmatprep.subr.mxu0 0.0
    %1292 = vmatpush1.msra.mxu0 0.0
    %1293 = vmatprep.subr.mxu0 0.0
    %1294 = vmatpush1.msra.mxu0 0.0
    %1295 = vmatprep.subr.mxu0 0.0
    %1296 = vmatpush1.msra.mxu0 0.0
    %1297 = vmatprep.subr.mxu0 0.0
    %1298 = vmatpush1.msra.mxu0 0.0
    %1299 = vmatprep.subr.mxu0 0.0
    %1300 = vmatpush1.msra.mxu0 0.0
    %1301 = vmatprep.subr.mxu0 0.0
    %1302 = vmatpush1.msra.mxu0 0.0
    %1303 = vmatprep.subr.mxu0 0.0
    %1304 = vmatpush1.msra.mxu0 0.0
    %1305 = vmatprep.subr.mxu0 0.0
    %1306 = vmatpush1.msra.mxu0 0.0
    %1307 = vmatprep.subr.mxu0 0.0
    %1308 = vmatpush1.msra.mxu0 0.0
    %1309 = vmatprep.subr.mxu0 0.0
    %1310 = vmatpush1.msra.mxu0 0.0
    %1311 = vmatprep.subr.mxu0 0.0
    %1312 = vmatpush1.msra.mxu0 0.0
    %1313 = vmatprep.subr.mxu0 0.0
    %1314 = vmatpush1.msra.mxu0 0.0
    %1315 = vmatprep.subr.mxu0 0.0
    %1316 = vmatpush1.msra.mxu0 0.0
    %1317 = vmatprep.mubr.f32.mxu0 0.0
    %1318 = vmatmul.mubr.f32.gmra.mrb[0].mxu0 %v1251
    %v1319 = vpop.f32.mrb[0].mxu0
    %v1320 = vadd.f32 0.0, %v1319
    %v1321 = vpop.f32.mrb[0].mxu0
    %1322 = vdwg.mxu0
    %v1323 = vld [vmem:[%s6] sm:$0x1]
    %v1325 = vsel %vm410, %v1323, 0
    %1327 = vmatprep.subr.mxu0 0.0
    %1328 = vmatpush1.msra.mxu0 %v409
    %1329 = vmatprep.subr.mxu0 0.0
    %1330 = vmatpush1.msra.mxu0 0.0
    %1331 = vmatprep.subr.mxu0 0.0
    %1332 = vmatpush1.msra.mxu0 0.0
    %1333 = vmatprep.subr.mxu0 0.0
    %1334 = vmatpush1.msra.mxu0 0.0
    %1335 = vmatprep.subr.mxu0 0.0
    %1336 = vmatpush1.msra.mxu0 0.0
    %1337 = vmatprep.subr.mxu0 0.0
    %1338 = vmatpush1.msra.mxu0 0.0
    %1339 = vmatprep.subr.mxu0 0.0
    %1340 = vmatpush1.msra.mxu0 0.0
    %1341 = vmatprep.subr.mxu0 0.0
    %1342 = vmatpush1.msra.mxu0 0.0
    %1343 = vmatprep.subr.mxu0 0.0
    %1344 = vmatpush1.msra.mxu0 0.0
    %1345 = vmatprep.subr.mxu0 0.0
    %1346 = vmatpush1.msra.mxu0 0.0
    %1347 = vmatprep.subr.mxu0 0.0
    %1348 = vmatpush1.msra.mxu0 0.0
    %1349 = vmatprep.subr.mxu0 0.0
    %1350 = vmatpush1.msra.mxu0 0.0
    %1351 = vmatprep.subr.mxu0 0.0
    %1352 = vmatpush1.msra.mxu0 0.0
    %1353 = vmatprep.subr.mxu0 0.0
    %1354 = vmatpush1.msra.mxu0 0.0
    %1355 = vmatprep.subr.mxu0 0.0
    %1356 = vmatpush1.msra.mxu0 0.0
    %1357 = vmatprep.subr.mxu0 0.0
    %1358 = vmatpush1.msra.mxu0 0.0
    %1359 = vmatprep.subr.mxu0 0.0
    %1360 = vmatpush1.msra.mxu0 0.0
    %1361 = vmatprep.subr.mxu0 0.0
    %1362 = vmatpush1.msra.mxu0 0.0
    %1363 = vmatprep.subr.mxu0 0.0
    %1364 = vmatpush1.msra.mxu0 0.0
    %1365 = vmatprep.subr.mxu0 0.0
    %1366 = vmatpush1.msra.mxu0 0.0
    %1367 = vmatprep.subr.mxu0 0.0
    %1368 = vmatpush1.msra.mxu0 0.0
    %1369 = vmatprep.subr.mxu0 0.0
    %1370 = vmatpush1.msra.mxu0 0.0
    %1371 = vmatprep.subr.mxu0 0.0
    %1372 = vmatpush1.msra.mxu0 0.0
    %1373 = vmatprep.subr.mxu0 0.0
    %1374 = vmatpush1.msra.mxu0 0.0
    %1375 = vmatprep.subr.mxu0 0.0
    %1376 = vmatpush1.msra.mxu0 0.0
    %1377 = vmatprep.subr.mxu0 0.0
    %1378 = vmatpush1.msra.mxu0 0.0
    %1379 = vmatprep.subr.mxu0 0.0
    %1380 = vmatpush1.msra.mxu0 0.0
    %1381 = vmatprep.subr.mxu0 0.0
    %1382 = vmatpush1.msra.mxu0 0.0
    %1383 = vmatprep.subr.mxu0 0.0
    %1384 = vmatpush1.msra.mxu0 0.0
    %1385 = vmatprep.subr.mxu0 0.0
    %1386 = vmatpush1.msra.mxu0 0.0
    %1387 = vmatprep.subr.mxu0 0.0
    %1388 = vmatpush1.msra.mxu0 0.0
    %1389 = vmatprep.subr.mxu0 0.0
    %1390 = vmatpush1.msra.mxu0 0.0
    %1391 = vmatprep.mubr.f32.mxu0 0.0
    %1392 = vmatmul.mubr.f32.gmra.mrb[0].mxu0 %v1325
    %v1393 = vpop.f32.mrb[0].mxu0
    %v1394 = vadd.f32 0.0, %v1393
    %v1395 = vpop.f32.mrb[0].mxu0
    %1396 = vdwg.mxu0
    %v1397 = vlaneseq
    %v1398 = vshrl.u32 %v1397, 7
    %v1399 = vsub.s32 0, %v1398
    %v1400 = vrot.slane %v1320, %v1399
    %v1401 = vmul.f32 %v1158, %v1400
    %v1402 = vmul.f32 %v1159, %v1400
    %v1403 = vmul.f32 %v1160, %v1400
    %v1404 = vmul.f32 %v1161, %v1400
    %v1405 = vlaneseq
    %v1406 = vshrl.u32 %v1405, 7
    %v1407 = vsub.s32 0, %v1406
    %v1408 = vrot.slane %v1394, %v1407
    %v1409 = vadd.f32 %v1401, %v1408
    %v1410 = vadd.f32 %v1402, %v1408
    %v1411 = vadd.f32 %v1403, %v1408
    %v1412 = vadd.f32 %v1404, %v1408
    %v1413 = vadd.f32 %v1409, %v61
    %v1414 = vadd.f32 %v1410, %v62
    %v1415 = vadd.f32 %v1411, %v63
    %v1416 = vadd.f32 %v1412, %v64
    %1417 = vst [vmem:[#allocation7] sm:$0xff] %v1413
    %1418 = vst [vmem:[#allocation7 + $0x8] sm:$0xff] %v1414
    %1419 = vst [vmem:[#allocation7 + $0x10] sm:$0xff] %v1415
    %1420 = vst [vmem:[#allocation7 + $0x18] sm:$0xff] %v1416
    // Predicated region
    $region46: #{tpu_custom_call.1} parent=1 // pred_check
      _
    $region47: #{tpu_custom_call.1} parent=1 // pred_check_branch
      %1422 = sbr.rel (0) target = $region49
    $region48: #{tpu_custom_call.1} parent=1 // pred_region
      %s1424 = ssub.s32 512, 512
      %1425 = vsyncadd [#allocation4], %s1424
      %s1426 = sshll.u32 [#allocation7], 4
      %s1427 = int_to_ptr.vmem [resolvable:$true] %s1426
      %1432 = dma.vmem_to_hbm [thread:$0]  %s1427, 512, %s9, [#allocation4], 128, 128, 8
    $region49: #{tpu_custom_call.1} parent=1 // pred_fallthru
      _
    // Predicated region
    $region50: #{tpu_custom_call.1} parent=1 // pred_check
      _
    $region51: #{tpu_custom_call.1} parent=1 // pred_check_branch
      %1434 = sbr.rel (0) target = $region53
    $region52: #{tpu_custom_call.1} parent=1 // pred_region
      %1435 = dma.done [#allocation4], 512
    $region53: #{tpu_custom_call.1} parent=1 // pred_fallthru
      _
    %1436 = vsyncpa [#allocation3], 1
    %1437 = vsyncpa [#allocation6], 1
    %1438 = vsyncpa [#allocation4], 1

</llo_original>
